<compile_context>
chip_gen: v7x
topology: tpu7x:2x2x1
jax: 0.10.0
libtpu: 0.0.40
codegen_flags: <defaults>
</compile_context>

<pallas_src>
import functools

import jax
import jax.numpy as jnp
import numpy as np
from jax import lax
from jax.experimental import pallas as pl
from jax.experimental.pallas import tpu as pltpu


def _rotate_half(t, hd2):
    """[tE | tO] -> [tO | tE] along the last axis (static shapes)."""
    hd = 2 * hd2
    if hd % 128 == 0:
        # Lane-dense XLU rotation at production head_dim.
        return pltpu.roll(t, shift=hd2, axis=1)
    # Tiny head_dim (demo shapes): a mid-vreg roll is masked layout work either way.
    return jnp.concatenate([t[:, hd2:], t[:, :hd2]], axis=1)


# ----------------------------------------------------------------------------
# Kernel: grid = (batch, head_group).  One group of `heads_per_step` heads per
# step; RMSNorm1 + mask build at group==0, residual + RMSNorm2 + SwiGLU FFN at
# group==num_groups-1.
# ----------------------------------------------------------------------------
def transformer_block_kernel(
    x_ref,      # (1, S, H)         f32
    g1_ref,     # (1, H)            f32   RMSNorm1 scale
    cos_ref,    # (S, hd)           f32   [cos | cos]
    sin_ref,    # (S, hd)           f32   [-sin | sin]
    wqkv_ref,   # (1, H, hp*3*hd)   bf16  per-group fused [q|k|v] x hp heads
    wo_ref,     # (1, hp*hd, H)     bf16  per-group out-proj rows
    g2_ref,     # (1, H)            f32   RMSNorm2 scale
    w12_ref,    # (H, 2*I)          bf16  fused [w1^T | w2^T]
    w3_ref,     # (I, H)            bf16  w3^T
    out_ref,    # (1, S, H)         f32
    xn_s,       # VMEM (S, H)  bf16  cached RMSNorm1 output
    acc_s,      # VMEM (S, H)  f32   x + sum_h ctx_h @ wo_h
    mask_s,     # VMEM (S, S)  bf16  additive causal mask (0 / -1e30)
    *,
    heads_per_step: int,
    num_groups: int,
    bf16_exp: bool,
    eps: float = 1e-6,
):
    g = pl.program_id(1)
    hp = heads_per_step
    hd = wo_ref.shape[1] // hp
    hd2 = hd // 2
    S = x_ref.shape[1]

    # ---- once per batch element: RMSNorm1, residual seed, causal mask --------
    @pl.when(g == 0)
    def _init():
        x = x_ref[0]                                              # (S, H) f32
        ms = jnp.mean(x * x, axis=-1, keepdims=True)
        xn_s[...] = (x * lax.rsqrt(ms + eps) * g1_ref[...]).astype(jnp.bfloat16)
        acc_s[...] = x                                            # residual folded in
        row = lax.broadcasted_iota(jnp.int32, (S, S), 0)
        col = lax.broadcasted_iota(jnp.int32, (S, S), 1)
        mask_s[...] = jnp.where(row >= col, 0.0, -1e30).astype(jnp.bfloat16)

    # ---- fused QKV projection for the whole head group ------------------------
    xn = xn_s[...]                                                # (S, H) bf16
    qkv = jnp.dot(xn, wqkv_ref[0],
                  preferred_element_type=jnp.float32)             # (S, hp*3*hd) f32

    cos = cos_ref[...]                                            # (S, hd) f32
    sin = sin_ref[...]
    neg_mask = mask_s[...].astype(jnp.float32)                    # (S, S)
    scale = 1.0 / float(np.sqrt(hd))
    dn = (((1,), (1,)), ((), ()))      # contract last dims of both operands (no .T)

    ctx_list = []
    for h in range(hp):                # static unroll (hp is small)
        base = h * 3 * hd
        q = qkv[:, base:base + hd]                                # [even | odd] order
        k = qkv[:, base + hd:base + 2 * hd]
        v = qkv[:, base + 2 * hd:base + 3 * hd]                   # natural order

        # RoPE: q*[cos|cos] + rotate_half(q)*[-sin|sin]  (all f32, no half-slices)
        q_rot = q * cos + _rotate_half(q, hd2) * sin
        k_rot = k * cos + _rotate_half(k, hd2) * sin

        s = lax.dot_general(q_rot.astype(jnp.bfloat16), k_rot.astype(jnp.bfloat16),
                            dn, preferred_element_type=jnp.float32)
        s = s * scale + neg_mask                                  # causal (additive)

        # softmax with deferred normalization
        m = jnp.max(s, axis=-1, keepdims=True)
        if bf16_exp:
            p = jnp.exp((s - m).astype(jnp.bfloat16))             # EUP bf16 (v6e/v7x)
            l = jnp.sum(p.astype(jnp.float32), axis=-1, keepdims=True)
            p_mm = p
        else:
            p = jnp.exp(s - m)                                    # f32 (v5e-safe)
            l = jnp.sum(p, axis=-1, keepdims=True)
            p_mm = p.astype(jnp.bfloat16)

        ctx = jnp.dot(p_mm, v.astype(jnp.bfloat16),
                      preferred_element_type=jnp.float32)         # (S, hd)
        ctx = ctx * pl.reciprocal(l, approx=True)                 # one scale per row
        ctx_list.append(ctx.astype(jnp.bfloat16))

    # ---- one out-projection dot per group (K = hp*hd), one accumulator RMW ----
    ctx_cat = ctx_list[0] if hp == 1 else jnp.concatenate(ctx_list, axis=1)
    acc_s[...] += jnp.dot(ctx_cat, wo_ref[0],
                          preferred_element_type=jnp.float32)     # (S, H)

    # ---- once per batch element: RMSNorm2 + fused SwiGLU FFN + residual -------
    @pl.when(g == num_groups - 1)
    def _finish():
        h_res = acc_s[...]                                        # (S, H) f32
        ms2 = jnp.mean(h_res * h_res, axis=-1, keepdims=True)
        hn = (h_res * lax.rsqrt(ms2 + eps) * g2_ref[...]).astype(jnp.bfloat16)

        x12 = jnp.dot(hn, w12_ref[...],
                      preferred_element_type=jnp.float32)         # (S, 2I)
        I = w3_ref.shape[0]
        x1 = x12[:, :I]
        x2 = x12[:, I:]
        x1 = x1 * jax.nn.sigmoid(x1)                              # SiLU (f32)
        ff = jnp.dot((x1 * x2).astype(jnp.bfloat16), w3_ref[...],
                     preferred_element_type=jnp.float32)          # (S, H)

        out_ref[0] = (h_res + ff).astype(out_ref.dtype)


# ----------------------------------------------------------------------------
# Wrapper: weight fusion / permutation (trace-time) + pallas_call plumbing.
# ----------------------------------------------------------------------------
def _default_bf16_exp():
    try:
        kind = jax.devices()[0].device_kind.lower()
        return ("v6" in kind) or ("v7" in kind)
    except Exception:
        return False


def _default_vmem_limit():
    try:
        cap = int(pltpu.get_tpu_info().vmem_capacity_bytes)
        return max(32 * 1024 * 1024, cap - 16 * 1024 * 1024)
    except Exception:
        return 64 * 1024 * 1024


def transformer_block_pallas(x, params, cos, sin, num_heads, *,
                             heads_per_step=2, bf16_softmax_exp=None,
                             vmem_limit_bytes=None):
    B, S, H = x.shape
    hd = H // num_heads
    hd2 = hd // 2
    I = params["w1"].shape[0]

    hp = max(1, min(int(heads_per_step), num_heads))
    while num_heads % hp:
        hp -= 1
    num_groups = num_heads // hp

    if bf16_softmax_exp is None:
        bf16_softmax_exp = _default_bf16_exp()
    if vmem_limit_bytes is None:
        vmem_limit_bytes = _default_vmem_limit()

    wqT = jnp.asarray(params["wq"]).T            # (H_in, H_out)
    wkT = jnp.asarray(params["wk"]).T
    wvT = jnp.asarray(params["wv"]).T

    # Per-group fused QKV weight (num_groups, H, hp*3*hd): q/k columns reordered
    # [even | odd] within each head so RoPE is rotate-half + elementwise; v stays in
    # natural order so the out-projection needs no compensation.
    qk_perm = np.concatenate([np.arange(0, hd, 2), np.arange(1, hd, 2)])
    group_blocks = []
    for grp in range(num_groups):
        cols = []
        for h in range(grp * hp, (grp + 1) * hp):
            base = h * hd
            cols.append(jnp.concatenate(
                [wqT[:, base + qk_perm], wkT[:, base + qk_perm],
                 wvT[:, base:base + hd]], axis=1))
        group_blocks.append(jnp.concatenate(cols, axis=1))        # (H, hp*3*hd)
    wqkv = jnp.stack(group_blocks, axis=0).astype(jnp.bfloat16)   # (nG, H, hp*3*hd)

    wo_blocks = (jnp.asarray(params["wo"]).T
                 .reshape(num_groups, hp * hd, H).astype(jnp.bfloat16))
    w12 = jnp.concatenate([jnp.asarray(params["w1"]).T,
                           jnp.asarray(params["w2"]).T], axis=1).astype(jnp.bfloat16)
    w3T = jnp.asarray(params["w3"]).T.astype(jnp.bfloat16)        # (I, H)

    g1 = jnp.asarray(params["g1"]).reshape(1, H).astype(jnp.float32)
    g2 = jnp.asarray(params["g2"]).reshape(1, H).astype(jnp.float32)

    cos_half = jnp.asarray(cos, jnp.float32)                      # (S, hd/2)
    sin_half = jnp.asarray(sin, jnp.float32)
    cos_full = jnp.concatenate([cos_half, cos_half], axis=1)      # (S, hd)
    sin_signed = jnp.concatenate([-sin_half, sin_half], axis=1)   # (S, hd)

    kernel = functools.partial(
        transformer_block_kernel,
        heads_per_step=hp, num_groups=num_groups, bf16_exp=bool(bf16_softmax_exp))

    const2 = lambda b, g: (0, 0)
    grid_spec = pltpu.PrefetchScalarGridSpec(
        num_scalar_prefetch=0,
        grid=(B, num_groups),
        in_specs=[
            pl.BlockSpec((1, S, H), lambda b, g: (b, 0, 0)),            # x
            pl.BlockSpec((1, H), const2),                               # g1
            pl.BlockSpec((S, hd), const2),                              # cos_full
            pl.BlockSpec((S, hd), const2),                              # sin_signed
            pl.BlockSpec((1, H, hp * 3 * hd), lambda b, g: (g, 0, 0)),  # wqkv (streamed)
            pl.BlockSpec((1, hp * hd, H), lambda b, g: (g, 0, 0)),      # wo   (streamed)
            pl.BlockSpec((1, H), const2),                               # g2
            pl.BlockSpec((H, 2 * I), const2),                           # w1|w2
            pl.BlockSpec((I, H), const2),                               # w3
        ],
        out_specs=pl.BlockSpec((1, S, H), lambda b, g: (b, 0, 0)),
        scratch_shapes=[
            pltpu.VMEM((S, H), jnp.bfloat16),   # cached RMSNorm1 output
            pltpu.VMEM((S, H), jnp.float32),    # residual + attention accumulator
            pltpu.VMEM((S, S), jnp.bfloat16),   # additive causal mask
        ],
    )

    return pl.pallas_call(
        kernel,
        out_shape=jax.ShapeDtypeStruct((B, S, H), jnp.float32),
        grid_spec=grid_spec,
        compiler_params=pltpu.CompilerParams(
            # Head-group axis is a reduction into acc_s -> must stay "arbitrary"
            # (sequential on one core); batch is safely "parallel" (megacore).
            dimension_semantics=("parallel", "arbitrary"),
            vmem_limit_bytes=int(vmem_limit_bytes),
        ),
    )(x, g1, cos_full, sin_signed, wqkv, wo_blocks, g2, w12, w3T)


# ----------------------------------------------------------------------------
# Pure-JAX reference (mirrors the PyTorch module exactly, f32).
# ----------------------------------------------------------------------------
def _rms_norm(x, g, eps=1e-6):
    return x * lax.rsqrt(jnp.mean(x * x, axis=-1, keepdims=True) + eps) * g


def reference_block(x, params, cos, sin, num_heads):
    B, S, H = x.shape
    hd = H // num_heads

    xn = _rms_norm(x, params["g1"])
    q = xn @ params["wq"].T
    k = xn @ params["wk"].T
    v = xn @ params["wv"].T

    def split(t):
        return t.reshape(B, S, num_heads, hd).transpose(0, 2, 1, 3)

    q, k, v = split(q), split(k), split(v)

    def rope(t):
        tr = t.reshape(B, num_heads, S, hd // 2, 2)
        c = cos.reshape(1, 1, S, hd // 2)
        s = sin.reshape(1, 1, S, hd // 2)
        o0 = tr[..., 0] * c - tr[..., 1] * s
        o1 = tr[..., 0] * s + tr[..., 1] * c
        return jnp.stack([o0, o1], axis=-1).reshape(B, num_heads, S, hd)

    q, k = rope(q), rope(k)

    scores = jnp.einsum("bhqd,bhkd->bhqk", q, k) / jnp.sqrt(jnp.float32(hd))
    mask = jnp.tril(jnp.ones((S, S), dtype=bool))
    scores = jnp.where(mask, scores, -jnp.inf)
    attn = jax.nn.softmax(scores, axis=-1)
    ctx = jnp.einsum("bhqk,bhkd->bhqd", attn, v)
    ctx = ctx.transpose(0, 2, 1, 3).reshape(B, S, H)

    h = x + ctx @ params["wo"].T
    hn = _rms_norm(h, params["g2"])
    x1 = jax.nn.silu(hn @ params["w1"].T)
    x2 = hn @ params["w2"].T
    return h + (x1 * x2) @ params["w3"].T


# ----------------------------------------------------------------------------
if __name__ == "__main__":
    B, S, H = 2, 8, 32
    num_heads = 4
    head_dim = H // num_heads          # 8 (even -> RoPE ok)
    intermediate = 64

    key = jax.random.PRNGKey(0)
    ks = jax.random.split(key, 8)
    scale_init = 0.05
    params = {
        "g1": jnp.ones((H,), jnp.float32),
        "g2": jnp.ones((H,), jnp.float32),
        "wq": jax.random.normal(ks[0], (H, H), jnp.float32) * scale_init,
        "wk": jax.random.normal(ks[1], (H, H), jnp.float32) * scale_init,
        "wv": jax.random.normal(ks[2], (H, H), jnp.float32) * scale_init,
        "wo": jax.random.normal(ks[3], (H, H), jnp.float32) * scale_init,
        "w1": jax.random.normal(ks[4], (intermediate, H), jnp.float32) * scale_init,
        "w2": jax.random.normal(ks[5], (intermediate, H), jnp.float32) * scale_init,
        "w3": jax.random.normal(ks[6], (H, intermediate), jnp.float32) * scale_init,
    }
    x = jax.random.normal(ks[7], (B, S, H), jnp.float32)

    # RoPE tables (dim = head_dim, max_seq_len = S, base = 10000) — same as PyTorch class.
    freqs = 1.0 / (10000.0 ** (2.0 * jnp.arange(0, head_dim // 2, dtype=jnp.float32) / head_dim))
    pos = jnp.arange(0, S, dtype=jnp.float32)
    theta = jnp.outer(pos, freqs)
    cos_t, sin_t = jnp.cos(theta), jnp.sin(theta)      # (S, head_dim//2)

    out = transformer_block_pallas(x, params, cos_t, sin_t, num_heads, heads_per_step=2)
    out = jax.block_until_ready(out)

    ref = jax.block_until_ready(reference_block(x, params, cos_t, sin_t, num_heads))
    np.testing.assert_allclose(np.asarray(out), np.asarray(ref), rtol=1e-2, atol=1e-2)

    print("KERNEL_OK")
</pallas_src>

<mosaic_0001>
module attributes {stable_mosaic.version = 11 : i64} {
  func.func @transformer_block_kernel(%arg0: i32, %arg1: i32, %arg2: memref<1x8x32xf32, #tpu.memory_space<vmem>>, %arg3: memref<1x32xf32, #tpu.memory_space<vmem>>, %arg4: memref<8x8xf32, #tpu.memory_space<vmem>>, %arg5: memref<8x8xf32, #tpu.memory_space<vmem>>, %arg6: memref<1x32x48xbf16, #tpu.memory_space<vmem>>, %arg7: memref<1x16x32xbf16, #tpu.memory_space<vmem>>, %arg8: memref<1x32xf32, #tpu.memory_space<vmem>>, %arg9: memref<32x128xbf16, #tpu.memory_space<vmem>>, %arg10: memref<64x32xbf16, #tpu.memory_space<vmem>>, %arg11: memref<1x8x32xf32, #tpu.memory_space<vmem>>, %arg12: memref<8x32xbf16, #tpu.memory_space<vmem>>, %arg13: memref<8x32xf32, #tpu.memory_space<vmem>>, %arg14: memref<8x8xbf16, #tpu.memory_space<vmem>>) attributes {dimension_semantics = [#tpu.dimension_semantics<parallel>, #tpu.dimension_semantics<arbitrary>], iteration_bounds = array<i64: 2, 2>, scalar_prefetch = 0 : i64, scratch_operands = 3 : i64, tpu.core_type = #tpu.core_type<tc>, window_params = [{transform_indices = @transform_0, window_bounds = array<i64: 1, 8, 32>}, {pipeline_mode = #tpu.pipeline_mode<synchronous>, transform_indices = @transform_1, window_bounds = array<i64: 1, 32>}, {pipeline_mode = #tpu.pipeline_mode<synchronous>, transform_indices = @transform_2, window_bounds = array<i64: 8, 8>}, {pipeline_mode = #tpu.pipeline_mode<synchronous>, transform_indices = @transform_3, window_bounds = array<i64: 8, 8>}, {transform_indices = @transform_4, window_bounds = array<i64: 1, 32, 48>}, {transform_indices = @transform_5, window_bounds = array<i64: 1, 16, 32>}, {pipeline_mode = #tpu.pipeline_mode<synchronous>, transform_indices = @transform_6, window_bounds = array<i64: 1, 32>}, {pipeline_mode = #tpu.pipeline_mode<synchronous>, transform_indices = @transform_7, window_bounds = array<i64: 32, 128>}, {pipeline_mode = #tpu.pipeline_mode<synchronous>, transform_indices = @transform_8, window_bounds = array<i64: 64, 32>}, {transform_indices = @transform_9, window_bounds = array<i64: 1, 8, 32>}]} {
    %c0_i32 = arith.constant 0 : i32
    %0 = arith.cmpi eq, %arg1, %c0_i32 : i32
    %1 = arith.extui %0 : i1 to i32
    %c0_i32_0 = arith.constant 0 : i32
    %2 = arith.cmpi ne, %1, %c0_i32_0 : i32
    scf.if %2 {
      %c0_30 = arith.constant 0 : index
      %c0_31 = arith.constant 0 : index
      %c0_32 = arith.constant 0 : index
      %91 = vector.load %arg2[%c0_30, %c0_31, %c0_32] : memref<1x8x32xf32, #tpu.memory_space<vmem>>, vector<1x8x32xf32>
      %92 = vector.shape_cast %91 : vector<1x8x32xf32> to vector<8x32xf32>
      %93 = arith.mulf %92, %92 : vector<8x32xf32>
      %cst_33 = arith.constant dense<0.000000e+00> : vector<8xf32>
      %94 = vector.multi_reduction <add>, %93, %cst_33 [1] : vector<8x32xf32> to vector<8xf32>
      %95 = vector.shape_cast %94 : vector<8xf32> to vector<8x1xf32>
      %cst_34 = arith.constant 3.200000e+01 : f32
      %96 = vector.broadcast %cst_34 : f32 to vector<8x1xf32>
      %97 = arith.divf %95, %96 : vector<8x1xf32>
      %cst_35 = arith.constant 9.99999997E-7 : f32
      %98 = vector.broadcast %cst_35 : f32 to vector<8x1xf32>
      %99 = arith.addf %97, %98 : vector<8x1xf32>
      %100 = math.rsqrt %99 : vector<8x1xf32>
      %101 = vector.broadcast %100 : vector<8x1xf32> to vector<8x32xf32>
      %102 = arith.mulf %92, %101 : vector<8x32xf32>
      %c0_36 = arith.constant 0 : index
      %c0_37 = arith.constant 0 : index
      %103 = vector.load %arg3[%c0_36, %c0_37] : memref<1x32xf32, #tpu.memory_space<vmem>>, vector<1x32xf32>
      %104 = vector.broadcast %103 : vector<1x32xf32> to vector<8x32xf32>
      %105 = arith.mulf %102, %104 : vector<8x32xf32>
      %106 = arith.truncf %105 : vector<8x32xf32> to vector<8x32xbf16>
      %c0_38 = arith.constant 0 : index
      %c0_39 = arith.constant 0 : index
      %107 = vector.load %arg12[%c0_38, %c0_39] : memref<8x32xbf16, #tpu.memory_space<vmem>>, vector<8x32xbf16>
      tpu.vector_store %arg12[%c0_38, %c0_39], %106 {strides = array<i32>} : memref<8x32xbf16, #tpu.memory_space<vmem>>, vector<8x32xbf16>,
      %c0_40 = arith.constant 0 : index
      %c0_41 = arith.constant 0 : index
      %108 = vector.load %arg13[%c0_40, %c0_41] : memref<8x32xf32, #tpu.memory_space<vmem>>, vector<8x32xf32>
      tpu.vector_store %arg13[%c0_40, %c0_41], %92 {strides = array<i32>} : memref<8x32xf32, #tpu.memory_space<vmem>>, vector<8x32xf32>,
      %109 = tpu.iota {dimensions = array<i32: 0>} : vector<8x8xi32>
      %110 = tpu.iota {dimensions = array<i32: 1>} : vector<8x8xi32>
      %111 = arith.cmpi sge, %109, %110 : vector<8x8xi32>
      %cst_42 = arith.constant 0.000000e+00 : f32
      %cst_43 = arith.constant -1.000000e+30 : f32
      %112 = vector.broadcast %cst_42 : f32 to vector<8x8xf32>
      %113 = vector.broadcast %cst_43 : f32 to vector<8x8xf32>
      %114 = arith.select %111, %112, %113 : vector<8x8xi1>, vector<8x8xf32>
      %115 = arith.truncf %114 : vector<8x8xf32> to vector<8x8xbf16>
      %c0_44 = arith.constant 0 : index
      %c0_45 = arith.constant 0 : index
      %116 = vector.load %arg14[%c0_44, %c0_45] : memref<8x8xbf16, #tpu.memory_space<vmem>>, vector<8x8xbf16>
      tpu.vector_store %arg14[%c0_44, %c0_45], %115 {strides = array<i32>} : memref<8x8xbf16, #tpu.memory_space<vmem>>, vector<8x8xbf16>,
    } else {
    }
    %c0 = arith.constant 0 : index
    %c0_1 = arith.constant 0 : index
    %3 = vector.load %arg12[%c0, %c0_1] : memref<8x32xbf16, #tpu.memory_space<vmem>>, vector<8x32xbf16>
    %c0_2 = arith.constant 0 : index
    %c0_3 = arith.constant 0 : index
    %c0_4 = arith.constant 0 : index
    %4 = vector.load %arg6[%c0_2, %c0_3, %c0_4] : memref<1x32x48xbf16, #tpu.memory_space<vmem>>, vector<1x32x48xbf16>
    %5 = vector.shape_cast %4 : vector<1x32x48xbf16> to vector<32x48xbf16>
    %cst = arith.constant dense<0.000000e+00> : vector<8x48xf32>
    %6 = tpu.matmul %3, %5, %cst {dimension_numbers = #tpu.dot_dimension_numbers<[1], [0], [0], [1], [0, 0, 1, 1], [], []>} : vector<8x32xbf16>, vector<32x48xbf16>, vector<8x48xf32> -> vector<8x48xf32>
    %c0_5 = arith.constant 0 : index
    %c0_6 = arith.constant 0 : index
    %7 = vector.load %arg4[%c0_5, %c0_6] : memref<8x8xf32, #tpu.memory_space<vmem>>, vector<8x8xf32>
    %c0_7 = arith.constant 0 : index
    %c0_8 = arith.constant 0 : index
    %8 = vector.load %arg5[%c0_7, %c0_8] : memref<8x8xf32, #tpu.memory_space<vmem>>, vector<8x8xf32>
    %c0_9 = arith.constant 0 : index
    %c0_10 = arith.constant 0 : index
    %9 = vector.load %arg14[%c0_9, %c0_10] : memref<8x8xbf16, #tpu.memory_space<vmem>>, vector<8x8xbf16>
    %10 = arith.extf %9 : vector<8x8xbf16> to vector<8x8xf32>
    %11 = vector.extract_strided_slice %6 {offsets = [0, 0], sizes = [8, 8], strides = [1, 1]} : vector<8x48xf32> to vector<8x8xf32>
    %12 = vector.extract_strided_slice %6 {offsets = [0, 8], sizes = [8, 8], strides = [1, 1]} : vector<8x48xf32> to vector<8x8xf32>
    %13 = vector.extract_strided_slice %6 {offsets = [0, 16], sizes = [8, 8], strides = [1, 1]} : vector<8x48xf32> to vector<8x8xf32>
    %14 = arith.mulf %11, %7 : vector<8x8xf32>
    %15 = vector.extract_strided_slice %11 {offsets = [0, 4], sizes = [8, 4], strides = [1, 1]} : vector<8x8xf32> to vector<8x4xf32>
    %16 = vector.extract_strided_slice %11 {offsets = [0, 0], sizes = [8, 4], strides = [1, 1]} : vector<8x8xf32> to vector<8x4xf32>
    %17 = tpu.concatenate %15, %16 in 1 : vector<8x4xf32>, vector<8x4xf32> -> vector<8x8xf32>
    %18 = arith.mulf %17, %8 : vector<8x8xf32>
    %19 = arith.addf %14, %18 : vector<8x8xf32>
    %20 = arith.mulf %12, %7 : vector<8x8xf32>
    %21 = vector.extract_strided_slice %12 {offsets = [0, 4], sizes = [8, 4], strides = [1, 1]} : vector<8x8xf32> to vector<8x4xf32>
    %22 = vector.extract_strided_slice %12 {offsets = [0, 0], sizes = [8, 4], strides = [1, 1]} : vector<8x8xf32> to vector<8x4xf32>
    %23 = tpu.concatenate %21, %22 in 1 : vector<8x4xf32>, vector<8x4xf32> -> vector<8x8xf32>
    %24 = arith.mulf %23, %8 : vector<8x8xf32>
    %25 = arith.addf %20, %24 : vector<8x8xf32>
    %26 = arith.truncf %19 : vector<8x8xf32> to vector<8x8xbf16>
    %27 = arith.truncf %25 : vector<8x8xf32> to vector<8x8xbf16>
    %cst_11 = arith.constant dense<0.000000e+00> : vector<8x8xf32>
    %28 = tpu.matmul %26, %27, %cst_11 {dimension_numbers = #tpu.dot_dimension_numbers<[1], [1], [0], [0], [0, 0, 1, 0], [], []>} : vector<8x8xbf16>, vector<8x8xbf16>, vector<8x8xf32> -> vector<8x8xf32>
    %cst_12 = arith.constant 0.353553385 : f32
    %29 = vector.broadcast %cst_12 : f32 to vector<8x8xf32>
    %30 = arith.mulf %28, %29 : vector<8x8xf32>
    %31 = arith.addf %30, %10 : vector<8x8xf32>
    %cst_13 = arith.constant dense<0xFF800000> : vector<8xf32>
    %32 = vector.multi_reduction <maximumf>, %31, %cst_13 [1] : vector<8x8xf32> to vector<8xf32>
    %33 = vector.shape_cast %32 : vector<8xf32> to vector<8x1xf32>
    %34 = vector.broadcast %33 : vector<8x1xf32> to vector<8x8xf32>
    %35 = arith.subf %31, %34 : vector<8x8xf32>
    %36 = math.exp %35 : vector<8x8xf32>
    %cst_14 = arith.constant dense<0.000000e+00> : vector<8xf32>
    %37 = vector.multi_reduction <add>, %36, %cst_14 [1] : vector<8x8xf32> to vector<8xf32>
    %38 = vector.shape_cast %37 : vector<8xf32> to vector<8x1xf32>
    %39 = arith.truncf %36 : vector<8x8xf32> to vector<8x8xbf16>
    %40 = arith.truncf %13 : vector<8x8xf32> to vector<8x8xbf16>
    %cst_15 = arith.constant dense<0.000000e+00> : vector<8x8xf32>
    %41 = tpu.matmul %39, %40, %cst_15 {dimension_numbers = #tpu.dot_dimension_numbers<[1], [0], [0], [1], [0, 0, 1, 1], [], []>} : vector<8x8xbf16>, vector<8x8xbf16>, vector<8x8xf32> -> vector<8x8xf32>
    %42 = tpu.reciprocal %38 {approx = true} : vector<8x1xf32> -> vector<8x1xf32>
    %43 = vector.broadcast %42 : vector<8x1xf32> to vector<8x8xf32>
    %44 = arith.mulf %41, %43 : vector<8x8xf32>
    %45 = arith.truncf %44 : vector<8x8xf32> to vector<8x8xbf16>
    %46 = vector.extract_strided_slice %6 {offsets = [0, 24], sizes = [8, 8], strides = [1, 1]} : vector<8x48xf32> to vector<8x8xf32>
    %47 = vector.extract_strided_slice %6 {offsets = [0, 32], sizes = [8, 8], strides = [1, 1]} : vector<8x48xf32> to vector<8x8xf32>
    %48 = vector.extract_strided_slice %6 {offsets = [0, 40], sizes = [8, 8], strides = [1, 1]} : vector<8x48xf32> to vector<8x8xf32>
    %49 = arith.mulf %46, %7 : vector<8x8xf32>
    %50 = vector.extract_strided_slice %46 {offsets = [0, 4], sizes = [8, 4], strides = [1, 1]} : vector<8x8xf32> to vector<8x4xf32>
    %51 = vector.extract_strided_slice %46 {offsets = [0, 0], sizes = [8, 4], strides = [1, 1]} : vector<8x8xf32> to vector<8x4xf32>
    %52 = tpu.concatenate %50, %51 in 1 : vector<8x4xf32>, vector<8x4xf32> -> vector<8x8xf32>
    %53 = arith.mulf %52, %8 : vector<8x8xf32>
    %54 = arith.addf %49, %53 : vector<8x8xf32>
    %55 = arith.mulf %47, %7 : vector<8x8xf32>
    %56 = vector.extract_strided_slice %47 {offsets = [0, 4], sizes = [8, 4], strides = [1, 1]} : vector<8x8xf32> to vector<8x4xf32>
    %57 = vector.extract_strided_slice %47 {offsets = [0, 0], sizes = [8, 4], strides = [1, 1]} : vector<8x8xf32> to vector<8x4xf32>
    %58 = tpu.concatenate %56, %57 in 1 : vector<8x4xf32>, vector<8x4xf32> -> vector<8x8xf32>
    %59 = arith.mulf %58, %8 : vector<8x8xf32>
    %60 = arith.addf %55, %59 : vector<8x8xf32>
    %61 = arith.truncf %54 : vector<8x8xf32> to vector<8x8xbf16>
    %62 = arith.truncf %60 : vector<8x8xf32> to vector<8x8xbf16>
    %cst_16 = arith.constant dense<0.000000e+00> : vector<8x8xf32>
    %63 = tpu.matmul %61, %62, %cst_16 {dimension_numbers = #tpu.dot_dimension_numbers<[1], [1], [0], [0], [0, 0, 1, 0], [], []>} : vector<8x8xbf16>, vector<8x8xbf16>, vector<8x8xf32> -> vector<8x8xf32>
    %cst_17 = arith.constant 0.353553385 : f32
    %64 = vector.broadcast %cst_17 : f32 to vector<8x8xf32>
    %65 = arith.mulf %63, %64 : vector<8x8xf32>
    %66 = arith.addf %65, %10 : vector<8x8xf32>
    %cst_18 = arith.constant dense<0xFF800000> : vector<8xf32>
    %67 = vector.multi_reduction <maximumf>, %66, %cst_18 [1] : vector<8x8xf32> to vector<8xf32>
    %68 = vector.shape_cast %67 : vector<8xf32> to vector<8x1xf32>
    %69 = vector.broadcast %68 : vector<8x1xf32> to vector<8x8xf32>
    %70 = arith.subf %66, %69 : vector<8x8xf32>
    %71 = math.exp %70 : vector<8x8xf32>
    %cst_19 = arith.constant dense<0.000000e+00> : vector<8xf32>
    %72 = vector.multi_reduction <add>, %71, %cst_19 [1] : vector<8x8xf32> to vector<8xf32>
    %73 = vector.shape_cast %72 : vector<8xf32> to vector<8x1xf32>
    %74 = arith.truncf %71 : vector<8x8xf32> to vector<8x8xbf16>
    %75 = arith.truncf %48 : vector<8x8xf32> to vector<8x8xbf16>
    %cst_20 = arith.constant dense<0.000000e+00> : vector<8x8xf32>
    %76 = tpu.matmul %74, %75, %cst_20 {dimension_numbers = #tpu.dot_dimension_numbers<[1], [0], [0], [1], [0, 0, 1, 1], [], []>} : vector<8x8xbf16>, vector<8x8xbf16>, vector<8x8xf32> -> vector<8x8xf32>
    %77 = tpu.reciprocal %73 {approx = true} : vector<8x1xf32> -> vector<8x1xf32>
    %78 = vector.broadcast %77 : vector<8x1xf32> to vector<8x8xf32>
    %79 = arith.mulf %76, %78 : vector<8x8xf32>
    %80 = arith.truncf %79 : vector<8x8xf32> to vector<8x8xbf16>
    %81 = tpu.concatenate %45, %80 in 1 : vector<8x8xbf16>, vector<8x8xbf16> -> vector<8x16xbf16>
    %c0_21 = arith.constant 0 : index
    %c0_22 = arith.constant 0 : index
    %82 = vector.load %arg13[%c0_21, %c0_22] : memref<8x32xf32, #tpu.memory_space<vmem>>, vector<8x32xf32>
    %c0_23 = arith.constant 0 : index
    %c0_24 = arith.constant 0 : index
    %c0_25 = arith.constant 0 : index
    %83 = vector.load %arg7[%c0_23, %c0_24, %c0_25] : memref<1x16x32xbf16, #tpu.memory_space<vmem>>, vector<1x16x32xbf16>
    %84 = vector.shape_cast %83 : vector<1x16x32xbf16> to vector<16x32xbf16>
    %cst_26 = arith.constant dense<0.000000e+00> : vector<8x32xf32>
    %85 = tpu.matmul %81, %84, %cst_26 {dimension_numbers = #tpu.dot_dimension_numbers<[1], [0], [0], [1], [0, 0, 1, 1], [], []>} : vector<8x16xbf16>, vector<16x32xbf16>, vector<8x32xf32> -> vector<8x32xf32>
    %86 = arith.addf %82, %85 : vector<8x32xf32>
    %c0_27 = arith.constant 0 : index
    %c0_28 = arith.constant 0 : index
    %87 = vector.load %arg13[%c0_27, %c0_28] : memref<8x32xf32, #tpu.memory_space<vmem>>, vector<8x32xf32>
    tpu.vector_store %arg13[%c0_27, %c0_28], %86 {strides = array<i32>} : memref<8x32xf32, #tpu.memory_space<vmem>>, vector<8x32xf32>,
    %c1_i32 = arith.constant 1 : i32
    %88 = arith.cmpi eq, %arg1, %c1_i32 : i32
    %89 = arith.extui %88 : i1 to i32
    %c0_i32_29 = arith.constant 0 : i32
    %90 = arith.cmpi ne, %89, %c0_i32_29 : i32
    scf.if %90 {
      %c0_30 = arith.constant 0 : index
      %c0_31 = arith.constant 0 : index
      %91 = vector.load %arg13[%c0_30, %c0_31] : memref<8x32xf32, #tpu.memory_space<vmem>>, vector<8x32xf32>
      %92 = arith.mulf %91, %91 : vector<8x32xf32>
      %cst_32 = arith.constant dense<0.000000e+00> : vector<8xf32>
      %93 = vector.multi_reduction <add>, %92, %cst_32 [1] : vector<8x32xf32> to vector<8xf32>
      %94 = vector.shape_cast %93 : vector<8xf32> to vector<8x1xf32>
      %cst_33 = arith.constant 3.200000e+01 : f32
      %95 = vector.broadcast %cst_33 : f32 to vector<8x1xf32>
      %96 = arith.divf %94, %95 : vector<8x1xf32>
      %cst_34 = arith.constant 9.99999997E-7 : f32
      %97 = vector.broadcast %cst_34 : f32 to vector<8x1xf32>
      %98 = arith.addf %96, %97 : vector<8x1xf32>
      %99 = math.rsqrt %98 : vector<8x1xf32>
      %100 = vector.broadcast %99 : vector<8x1xf32> to vector<8x32xf32>
      %101 = arith.mulf %91, %100 : vector<8x32xf32>
      %c0_35 = arith.constant 0 : index
      %c0_36 = arith.constant 0 : index
      %102 = vector.load %arg8[%c0_35, %c0_36] : memref<1x32xf32, #tpu.memory_space<vmem>>, vector<1x32xf32>
      %103 = vector.broadcast %102 : vector<1x32xf32> to vector<8x32xf32>
      %104 = arith.mulf %101, %103 : vector<8x32xf32>
      %105 = arith.truncf %104 : vector<8x32xf32> to vector<8x32xbf16>
      %c0_37 = arith.constant 0 : index
      %c0_38 = arith.constant 0 : index
      %106 = vector.load %arg9[%c0_37, %c0_38] : memref<32x128xbf16, #tpu.memory_space<vmem>>, vector<32x128xbf16>
      %cst_39 = arith.constant dense<0.000000e+00> : vector<8x128xf32>
      %107 = tpu.matmul %105, %106, %cst_39 {dimension_numbers = #tpu.dot_dimension_numbers<[1], [0], [0], [1], [0, 0, 1, 1], [], []>} : vector<8x32xbf16>, vector<32x128xbf16>, vector<8x128xf32> -> vector<8x128xf32>
      %108 = vector.extract_strided_slice %107 {offsets = [0, 0], sizes = [8, 64], strides = [1, 1]} : vector<8x128xf32> to vector<8x64xf32>
      %109 = vector.extract_strided_slice %107 {offsets = [0, 64], sizes = [8, 64], strides = [1, 1]} : vector<8x128xf32> to vector<8x64xf32>
      %110 = arith.negf %108 : vector<8x64xf32>
      %111 = math.exp %110 : vector<8x64xf32>
      %cst_40 = arith.constant 1.000000e+00 : f32
      %112 = vector.broadcast %cst_40 : f32 to vector<8x64xf32>
      %113 = arith.addf %112, %111 : vector<8x64xf32>
      %114 = arith.divf %112, %113 : vector<8x64xf32>
      %115 = arith.mulf %108, %114 : vector<8x64xf32>
      %116 = arith.mulf %115, %109 : vector<8x64xf32>
      %117 = arith.truncf %116 : vector<8x64xf32> to vector<8x64xbf16>
      %c0_41 = arith.constant 0 : index
      %c0_42 = arith.constant 0 : index
      %118 = vector.load %arg10[%c0_41, %c0_42] : memref<64x32xbf16, #tpu.memory_space<vmem>>, vector<64x32xbf16>
      %cst_43 = arith.constant dense<0.000000e+00> : vector<8x32xf32>
      %119 = tpu.matmul %117, %118, %cst_43 {dimension_numbers = #tpu.dot_dimension_numbers<[1], [0], [0], [1], [0, 0, 1, 1], [], []>} : vector<8x64xbf16>, vector<64x32xbf16>, vector<8x32xf32> -> vector<8x32xf32>
      %120 = arith.addf %91, %119 : vector<8x32xf32>
      %c0_44 = arith.constant 0 : index
      %c0_45 = arith.constant 0 : index
      %c0_46 = arith.constant 0 : index
      %121 = vector.load %arg11[%c0_44, %c0_45, %c0_46] : memref<1x8x32xf32, #tpu.memory_space<vmem>>, vector<1x8x32xf32>
      %122 = vector.shape_cast %121 : vector<1x8x32xf32> to vector<8x32xf32>
      %123 = vector.shape_cast %120 : vector<8x32xf32> to vector<1x8x32xf32>
      tpu.vector_store %arg11[%c0_44, %c0_45, %c0_46], %123 {strides = array<i32>} : memref<1x8x32xf32, #tpu.memory_space<vmem>>, vector<1x8x32xf32>,
    } else {
    }
    return
  }
  func.func @transform_0(%arg0: i32, %arg1: i32) -> (i32, i32, i32) {
    %c0_i32 = arith.constant 0 : i32
    %c0_i32_0 = arith.constant 0 : i32
    %c0_i32_1 = arith.constant 0 : i32
    return %arg0, %c0_i32, %c0_i32_0 : i32, i32, i32
  }
  func.func @transform_1(%arg0: i32, %arg1: i32) -> (i32, i32) {
    %c0_i32 = arith.constant 0 : i32
    %c0_i32_0 = arith.constant 0 : i32
    %c0_i32_1 = arith.constant 0 : i32
    return %c0_i32, %c0_i32_0 : i32, i32
  }
  func.func @transform_2(%arg0: i32, %arg1: i32) -> (i32, i32) {
    %c0_i32 = arith.constant 0 : i32
    %c0_i32_0 = arith.constant 0 : i32
    %c0_i32_1 = arith.constant 0 : i32
    return %c0_i32, %c0_i32_0 : i32, i32
  }
  func.func @transform_3(%arg0: i32, %arg1: i32) -> (i32, i32) {
    %c0_i32 = arith.constant 0 : i32
    %c0_i32_0 = arith.constant 0 : i32
    %c0_i32_1 = arith.constant 0 : i32
    return %c0_i32, %c0_i32_0 : i32, i32
  }
  func.func @transform_4(%arg0: i32, %arg1: i32) -> (i32, i32, i32) {
    %c0_i32 = arith.constant 0 : i32
    %c0_i32_0 = arith.constant 0 : i32
    %c0_i32_1 = arith.constant 0 : i32
    return %arg1, %c0_i32, %c0_i32_0 : i32, i32, i32
  }
  func.func @transform_5(%arg0: i32, %arg1: i32) -> (i32, i32, i32) {
    %c0_i32 = arith.constant 0 : i32
    %c0_i32_0 = arith.constant 0 : i32
    %c0_i32_1 = arith.constant 0 : i32
    return %arg1, %c0_i32, %c0_i32_0 : i32, i32, i32
  }
  func.func @transform_6(%arg0: i32, %arg1: i32) -> (i32, i32) {
    %c0_i32 = arith.constant 0 : i32
    %c0_i32_0 = arith.constant 0 : i32
    %c0_i32_1 = arith.constant 0 : i32
    return %c0_i32, %c0_i32_0 : i32, i32
  }
  func.func @transform_7(%arg0: i32, %arg1: i32) -> (i32, i32) {
    %c0_i32 = arith.constant 0 : i32
    %c0_i32_0 = arith.constant 0 : i32
    %c0_i32_1 = arith.constant 0 : i32
    return %c0_i32, %c0_i32_0 : i32, i32
  }
  func.func @transform_8(%arg0: i32, %arg1: i32) -> (i32, i32) {
    %c0_i32 = arith.constant 0 : i32
    %c0_i32_0 = arith.constant 0 : i32
    %c0_i32_1 = arith.constant 0 : i32
    return %c0_i32, %c0_i32_0 : i32, i32
  }
  func.func @transform_9(%arg0: i32, %arg1: i32) -> (i32, i32, i32) {
    %c0_i32 = arith.constant 0 : i32
    %c0_i32_0 = arith.constant 0 : i32
    %c0_i32_1 = arith.constant 0 : i32
    return %arg0, %c0_i32, %c0_i32_0 : i32, i32, i32
  }
}

</mosaic_0001>

<llo_original>
// kernel: tpu_custom_call.1
$region0: #{tpu_custom_call.1}
  #allocation0 [shape = 'u32[]', space=smem, size = 0x4, offset = 0x4, fixed_abs, tag = 'smem constant byte address 0x4 - core index']
  #allocation1 [shape = 'u32[144,128]{1,0:T(1,128)}', space=vmem, size = 0x12000, scoped, tag = 'internal scratch']
  #allocation2 [shape = 'bf16[8,32]{1,0:T(8,128)(2,1)}', space=vmem, size = 0x800, scoped, tag = 'scratch operand']
  #allocation3 [shape = 'f32[8,32]{1,0:T(8,128)}', space=vmem, size = 0x1000, scoped, tag = 'scratch operand']
  #allocation4 [shape = 'bf16[8,8]{1,0:T(8,128)(2,1)}', space=vmem, size = 0x800, scoped, tag = 'scratch operand']
  %s0 = inlined_call_operand.hbm [shape: f32[2,8,32], index: 0, kind: input, shape index: {}]
  %s1 = inlined_call_operand.hbm [shape: f32[1,32], index: 1, kind: input, shape index: {}]
  %s2 = inlined_call_operand.hbm [shape: f32[8,8], index: 2, kind: input, shape index: {}]
  %s3 = inlined_call_operand.hbm [shape: f32[8,8], index: 3, kind: input, shape index: {}]
  %s4 = inlined_call_operand.hbm [shape: bf16[2,32,48], index: 4, kind: input, shape index: {}]
  %s5 = inlined_call_operand.hbm [shape: bf16[2,16,32], index: 5, kind: input, shape index: {}]
  %s6 = inlined_call_operand.hbm [shape: f32[1,32], index: 6, kind: input, shape index: {}]
  %s7 = inlined_call_operand.hbm [shape: bf16[32,128], index: 7, kind: input, shape index: {}]
  %s8 = inlined_call_operand.hbm [shape: bf16[64,32], index: 8, kind: input, shape index: {}]
  %s9 = inlined_call_operand.hbm [shape: f32[2,8,32], index: 9, kind: output, shape index: {}]
  %s10 = sld [smem:[#allocation0]]
  $region113: #{tpu_custom_call.1} parent=0
    _
  %s12 = ssub.s32 1, %s10
  %s13 = scalar_select 0, %s12, %s10
  $region1: #{tpu_custom_call.1} parent=0
    #allocation5 [shape = 'u8[8192]{0}', space=vmem, size = 0x2000, scoped, tag = 'input window, operand 0']
    #allocation6 [shape = 's32[2]{0}', space=sflag, size = 0x8, scoped, tag = 'scoped memory for tpu_custom_call.1']
    #allocation7 [shape = 's32[2]{0}', space=sflag, size = 0x8, scoped, tag = 'scoped memory for tpu_custom_call.1']
    #allocation8 [shape = 'u8[512]{0}', space=vmem, size = 0x400, scoped, tag = 'input window, operand 1, single buffered']
    #allocation9 [shape = 's32[1]{0}', space=sflag, size = 0x4, scoped, tag = 'scoped memory for tpu_custom_call.1']
    #allocation10 [shape = 'u8[4096]{0}', space=vmem, size = 0x1000, scoped, tag = 'input window, operand 2, single buffered']
    #allocation11 [shape = 'u8[4096]{0}', space=vmem, size = 0x1000, scoped, tag = 'input window, operand 3, single buffered']
    #allocation12 [shape = 's32[1]{0}', space=sflag, size = 0x4, scoped, tag = 'scoped memory for tpu_custom_call.1']
    #allocation13 [shape = 'u8[16384]{0}', space=vmem, size = 0x4000, scoped, tag = 'input window, operand 4']
    #allocation14 [shape = 'u8[8192]{0}', space=vmem, size = 0x2000, scoped, tag = 'input window, operand 5']
    #allocation15 [shape = 'u8[512]{0}', space=vmem, size = 0x400, scoped, tag = 'input window, operand 6, single buffered']
    #allocation16 [shape = 'u8[8192]{0}', space=vmem, size = 0x2000, scoped, tag = 'input window, operand 7, single buffered']
    #allocation17 [shape = 'u8[16384]{0}', space=vmem, size = 0x4000, scoped, tag = 'input window, operand 8, single buffered']
    #allocation18 [shape = 's32[1]{0}', space=sflag, size = 0x4, scoped, tag = 'scoped memory for tpu_custom_call.1']
    #allocation19 [shape = 'u8[8192]{0}', space=vmem, size = 0x2000, scoped, tag = 'output window, operand 0']
    %14 = vsyncpa [#allocation6], 0
    %s15 = scalar_lea.sflag [#allocation6], 1
    %16 = vsyncpa %s15, 0
    %17 = vsyncpa [#allocation9], 0
    %18 = vsyncpa [#allocation12], 0
    %19 = vsyncpa [#allocation18], 0
    %20 = vsyncpa [#allocation7], 0
    %s21 = scalar_lea.sflag [#allocation7], 1
    %22 = vsyncpa %s21, 0
    loop: start=0, step=1, limit=6
    $region2: #{tpu_custom_call.1} parent=1 // loop_pre_header
      _
    $region3: #{tpu_custom_call.1} parent=1 // loop_header
      %s24 = sphi 0, %s28
      %p25 = scmp.ge.s32.totalorder %s24, 6
      %s31 = sphi 0, %s43
      %s32 = sphi 0, %s39
      %s33 = sphi 0, %s31
      %s34 = sphi 0, %s32
      %s35 = sphi 0, %s33
      %s36 = sphi 0, %s34
      %s46 = sphi 0, %s48
      %s49 = sphi 0, %s46
      %s50 = sphi 0, %s49
      %s66 = sphi 0, %s50
      %s70 = sphi 0, %s70
      %s72 = sphi 0, %s70
      %s73 = sphi 0, %s72
      %s87 = sphi 0, %s73
      %s91 = sphi 0, %s91
      %s93 = sphi 0, %s91
      %s94 = sphi 0, %s93
      %s108 = sphi 0, %s94
      %s112 = sphi 0, %s112
      %s114 = sphi 0, %s112
      %s115 = sphi 0, %s114
      %s129 = sphi 0, %s115
      %s135 = sphi 0, %s137
      %s138 = sphi 0, %s135
      %s139 = sphi 0, %s138
      %s155 = sphi 0, %s139
      %s161 = sphi 0, %s163
      %s164 = sphi 0, %s161
      %s165 = sphi 0, %s164
      %s181 = sphi 0, %s165
      %s185 = sphi 0, %s185
      %s187 = sphi 0, %s185
      %s188 = sphi 0, %s187
      %s202 = sphi 0, %s188
      %s206 = sphi 0, %s206
      %s208 = sphi 0, %s206
      %s209 = sphi 0, %s208
      %s223 = sphi 0, %s209
      %s227 = sphi 0, %s227
      %s229 = sphi 0, %s227
      %s230 = sphi 0, %s229
      %s244 = sphi 0, %s230
      %s250 = sphi 0, %s252
      %s253 = sphi 0, %s250
      %s254 = sphi 0, %s253
      %s270 = sphi 0, %s254
    $region4: #{tpu_custom_call.1} parent=1 // loop_header_branch
      %27 = sbr.rel (%p25) target = $region8
    $region5: #{tpu_custom_call.1} parent=1 // loop_body
      %s29 = ssub.s32 %s24, 1
      %s30 = ssub.s32 %s24, 2
      %s37 = sadd.s32 1, %s32
      %p38 = scmp.ge.s32.totalorder %s37, 2
      %s39 = scalar_select %p38, 0, %s37
      %s40 = sadd.s32 1, %s31
      %s41 = scalar_select %p38, %s40, %s31
      %p42 = scmp.ge.s32.totalorder %s41, 2
      %s43 = scalar_select %p42, 0, %s41
      %s44 = ssub.s32 %s31, %s43
      %p45 = scmp.eq.s32.totalorder %s44, 0
      %s47 = sadd.s32 %s46, 1
      %s48 = scalar_select %p45, %s46, %s47
      %p51 = pneg %p45
      %p52 = scmp.eq.s32.totalorder %s24, 3
      %p53 = por %p51, %p52
      %p54 = scmp.ne.s32.totalorder %s46, %s49
      %p55 = scmp.eq.s32.totalorder %s24, 0
      %p56 = por %p54, %p55
      %p57 = scmp.ne.s32.totalorder %s46, %s49
      %p58 = scmp.eq.s32.totalorder %s29, 3
      %p59 = por %p57, %p58
      %p60 = scmp.ne.s32.totalorder %s49, %s50
      %p61 = scmp.eq.s32.totalorder %s29, 0
      %p62 = por %p60, %p61
      %p63 = scmp.ne.s32.totalorder %s49, %s50
      %p64 = scmp.eq.s32.totalorder %s30, 3
      %p65 = por %p63, %p64
      %p67 = scmp.ne.s32.totalorder %s50, %s66
      %p68 = scmp.eq.s32.totalorder %s30, 0
      %p69 = por %p67, %p68
      %s71 = sadd.s32 %s70, 1
      %p74 = scmp.eq.s32.totalorder %s24, 3
      %p75 = scmp.ne.s32.totalorder %s70, %s72
      %p76 = scmp.eq.s32.totalorder %s24, 0
      %p77 = por %p75, %p76
      %p78 = scmp.ne.s32.totalorder %s70, %s72
      %p79 = scmp.eq.s32.totalorder %s29, 3
      %p80 = por %p78, %p79
      %p81 = scmp.ne.s32.totalorder %s72, %s73
      %p82 = scmp.eq.s32.totalorder %s29, 0
      %p83 = por %p81, %p82
      %p84 = scmp.ne.s32.totalorder %s72, %s73
      %p85 = scmp.eq.s32.totalorder %s30, 3
      %p86 = por %p84, %p85
      %p88 = scmp.ne.s32.totalorder %s73, %s87
      %p89 = scmp.eq.s32.totalorder %s30, 0
      %p90 = por %p88, %p89
      %s92 = sadd.s32 %s91, 1
      %p95 = scmp.eq.s32.totalorder %s24, 3
      %p96 = scmp.ne.s32.totalorder %s91, %s93
      %p97 = scmp.eq.s32.totalorder %s24, 0
      %p98 = por %p96, %p97
      %p99 = scmp.ne.s32.totalorder %s91, %s93
      %p100 = scmp.eq.s32.totalorder %s29, 3
      %p101 = por %p99, %p100
      %p102 = scmp.ne.s32.totalorder %s93, %s94
      %p103 = scmp.eq.s32.totalorder %s29, 0
      %p104 = por %p102, %p103
      %p105 = scmp.ne.s32.totalorder %s93, %s94
      %p106 = scmp.eq.s32.totalorder %s30, 3
      %p107 = por %p105, %p106
      %p109 = scmp.ne.s32.totalorder %s94, %s108
      %p110 = scmp.eq.s32.totalorder %s30, 0
      %p111 = por %p109, %p110
      %s113 = sadd.s32 %s112, 1
      %p116 = scmp.eq.s32.totalorder %s24, 3
      %p117 = scmp.ne.s32.totalorder %s112, %s114
      %p118 = scmp.eq.s32.totalorder %s24, 0
      %p119 = por %p117, %p118
      %p120 = scmp.ne.s32.totalorder %s112, %s114
      %p121 = scmp.eq.s32.totalorder %s29, 3
      %p122 = por %p120, %p121
      %p123 = scmp.ne.s32.totalorder %s114, %s115
      %p124 = scmp.eq.s32.totalorder %s29, 0
      %p125 = por %p123, %p124
      %p126 = scmp.ne.s32.totalorder %s114, %s115
      %p127 = scmp.eq.s32.totalorder %s30, 3
      %p128 = por %p126, %p127
      %p130 = scmp.ne.s32.totalorder %s115, %s129
      %p131 = scmp.eq.s32.totalorder %s30, 0
      %p132 = por %p130, %p131
      %s133 = ssub.s32 %s32, %s39
      %p134 = scmp.eq.s32.totalorder %s133, 0
      %s136 = sadd.s32 %s135, 1
      %s137 = scalar_select %p134, %s135, %s136
      %p140 = pneg %p134
      %p141 = scmp.eq.s32.totalorder %s24, 3
      %p142 = por %p140, %p141
      %p143 = scmp.ne.s32.totalorder %s135, %s138
      %p144 = scmp.eq.s32.totalorder %s24, 0
      %p145 = por %p143, %p144
      %p146 = scmp.ne.s32.totalorder %s135, %s138
      %p147 = scmp.eq.s32.totalorder %s29, 3
      %p148 = por %p146, %p147
      %p149 = scmp.ne.s32.totalorder %s138, %s139
      %p150 = scmp.eq.s32.totalorder %s29, 0
      %p151 = por %p149, %p150
      %p152 = scmp.ne.s32.totalorder %s138, %s139
      %p153 = scmp.eq.s32.totalorder %s30, 3
      %p154 = por %p152, %p153
      %p156 = scmp.ne.s32.totalorder %s139, %s155
      %p157 = scmp.eq.s32.totalorder %s30, 0
      %p158 = por %p156, %p157
      %s159 = ssub.s32 %s32, %s39
      %p160 = scmp.eq.s32.totalorder %s159, 0
      %s162 = sadd.s32 %s161, 1
      %s163 = scalar_select %p160, %s161, %s162
      %p166 = pneg %p160
      %p167 = scmp.eq.s32.totalorder %s24, 3
      %p168 = por %p166, %p167
      %p169 = scmp.ne.s32.totalorder %s161, %s164
      %p170 = scmp.eq.s32.totalorder %s24, 0
      %p171 = por %p169, %p170
      %p172 = scmp.ne.s32.totalorder %s161, %s164
      %p173 = scmp.eq.s32.totalorder %s29, 3
      %p174 = por %p172, %p173
      %p175 = scmp.ne.s32.totalorder %s164, %s165
      %p176 = scmp.eq.s32.totalorder %s29, 0
      %p177 = por %p175, %p176
      %p178 = scmp.ne.s32.totalorder %s164, %s165
      %p179 = scmp.eq.s32.totalorder %s30, 3
      %p180 = por %p178, %p179
      %p182 = scmp.ne.s32.totalorder %s165, %s181
      %p183 = scmp.eq.s32.totalorder %s30, 0
      %p184 = por %p182, %p183
      %s186 = sadd.s32 %s185, 1
      %p189 = scmp.eq.s32.totalorder %s24, 3
      %p190 = scmp.ne.s32.totalorder %s185, %s187
      %p191 = scmp.eq.s32.totalorder %s24, 0
      %p192 = por %p190, %p191
      %p193 = scmp.ne.s32.totalorder %s185, %s187
      %p194 = scmp.eq.s32.totalorder %s29, 3
      %p195 = por %p193, %p194
      %p196 = scmp.ne.s32.totalorder %s187, %s188
      %p197 = scmp.eq.s32.totalorder %s29, 0
      %p198 = por %p196, %p197
      %p199 = scmp.ne.s32.totalorder %s187, %s188
      %p200 = scmp.eq.s32.totalorder %s30, 3
      %p201 = por %p199, %p200
      %p203 = scmp.ne.s32.totalorder %s188, %s202
      %p204 = scmp.eq.s32.totalorder %s30, 0
      %p205 = por %p203, %p204
      %s207 = sadd.s32 %s206, 1
      %p210 = scmp.eq.s32.totalorder %s24, 3
      %p211 = scmp.ne.s32.totalorder %s206, %s208
      %p212 = scmp.eq.s32.totalorder %s24, 0
      %p213 = por %p211, %p212
      %p214 = scmp.ne.s32.totalorder %s206, %s208
      %p215 = scmp.eq.s32.totalorder %s29, 3
      %p216 = por %p214, %p215
      %p217 = scmp.ne.s32.totalorder %s208, %s209
      %p218 = scmp.eq.s32.totalorder %s29, 0
      %p219 = por %p217, %p218
      %p220 = scmp.ne.s32.totalorder %s208, %s209
      %p221 = scmp.eq.s32.totalorder %s30, 3
      %p222 = por %p220, %p221
      %p224 = scmp.ne.s32.totalorder %s209, %s223
      %p225 = scmp.eq.s32.totalorder %s30, 0
      %p226 = por %p224, %p225
      %s228 = sadd.s32 %s227, 1
      %p231 = scmp.eq.s32.totalorder %s24, 3
      %p232 = scmp.ne.s32.totalorder %s227, %s229
      %p233 = scmp.eq.s32.totalorder %s24, 0
      %p234 = por %p232, %p233
      %p235 = scmp.ne.s32.totalorder %s227, %s229
      %p236 = scmp.eq.s32.totalorder %s29, 3
      %p237 = por %p235, %p236
      %p238 = scmp.ne.s32.totalorder %s229, %s230
      %p239 = scmp.eq.s32.totalorder %s29, 0
      %p240 = por %p238, %p239
      %p241 = scmp.ne.s32.totalorder %s229, %s230
      %p242 = scmp.eq.s32.totalorder %s30, 3
      %p243 = por %p241, %p242
      %p245 = scmp.ne.s32.totalorder %s230, %s244
      %p246 = scmp.eq.s32.totalorder %s30, 0
      %p247 = por %p245, %p246
      %s248 = ssub.s32 %s31, %s43
      %p249 = scmp.eq.s32.totalorder %s248, 0
      %s251 = sadd.s32 %s250, 1
      %s252 = scalar_select %p249, %s250, %s251
      %p255 = pneg %p249
      %p256 = scmp.eq.s32.totalorder %s24, 3
      %p257 = por %p255, %p256
      %p258 = scmp.ne.s32.totalorder %s250, %s253
      %p259 = scmp.eq.s32.totalorder %s24, 0
      %p260 = por %p258, %p259
      %p261 = scmp.ne.s32.totalorder %s250, %s253
      %p262 = scmp.eq.s32.totalorder %s29, 3
      %p263 = por %p261, %p262
      %p264 = scmp.ne.s32.totalorder %s253, %s254
      %p265 = scmp.eq.s32.totalorder %s29, 0
      %p266 = por %p264, %p265
      %p267 = scmp.ne.s32.totalorder %s253, %s254
      %p268 = scmp.eq.s32.totalorder %s30, 3
      %p269 = por %p267, %p268
      %p271 = scmp.ne.s32.totalorder %s254, %s270
      %p272 = scmp.eq.s32.totalorder %s30, 0
      %p273 = por %p271, %p272
      %p274 = scmp.le.s32.totalorder 1, %s24
      %p275 = scmp.lt.s32.totalorder %s24, 5
      %p276 = pnand %p274, %p275
      %p277 = pneg %p276
      // Predicated region
      $region9: #{tpu_custom_call.1} parent=5 // pred_check
        _
      $region10: #{tpu_custom_call.1} parent=5 // pred_check_branch
        %279 = sbr.rel (%p276) target = $region12
      $region11: #{tpu_custom_call.1} parent=5 // pred_region
        %s280 = ssub.s32 %s24, 1
        // Predicated region
        $region13: #{tpu_custom_call.1} parent=11 // pred_check
          %p281 = pneg %p83
        $region14: #{tpu_custom_call.1} parent=11 // pred_check_branch
          %283 = sbr.rel (%p281) target = $region16
        $region15: #{tpu_custom_call.1} parent=11 // pred_region
          %s285 = ssub.s32 16, 16
          %286 = vsyncadd [#allocation9], %s285
          %s288 = sshll.u32 [#allocation8], 4
          %s289 = int_to_ptr.vmem [resolvable:$true] %s288
          %291 = dma.hbm_to_vmem [thread:$0]  %s1, 16, %s289, [#allocation9]
        $region16: #{tpu_custom_call.1} parent=11 // pred_fallthru
          _
        // Predicated region
        $region17: #{tpu_custom_call.1} parent=11 // pred_check
          %p292 = pneg %p104
        $region18: #{tpu_custom_call.1} parent=11 // pred_check_branch
          %294 = sbr.rel (%p292) target = $region20
        $region19: #{tpu_custom_call.1} parent=11 // pred_region
          %s296 = ssub.s32 128, 128
          %297 = vsyncadd [#allocation9], %s296
          %s299 = sshll.u32 [#allocation10], 4
          %s300 = int_to_ptr.vmem [resolvable:$true] %s299
          %302 = dma.hbm_to_vmem [thread:$0]  %s2, 128, %s300, [#allocation9]
        $region20: #{tpu_custom_call.1} parent=11 // pred_fallthru
          _
        // Predicated region
        $region21: #{tpu_custom_call.1} parent=11 // pred_check
          %p303 = pneg %p125
        $region22: #{tpu_custom_call.1} parent=11 // pred_check_branch
          %305 = sbr.rel (%p303) target = $region24
        $region23: #{tpu_custom_call.1} parent=11 // pred_region
          %s307 = ssub.s32 128, 128
          %308 = vsyncadd [#allocation12], %s307
          %s310 = sshll.u32 [#allocation11], 4
          %s311 = int_to_ptr.vmem [resolvable:$true] %s310
          %313 = dma.hbm_to_vmem [thread:$0]  %s3, 128, %s311, [#allocation12]
        $region24: #{tpu_custom_call.1} parent=11 // pred_fallthru
          _
        // Predicated region
        $region25: #{tpu_custom_call.1} parent=11 // pred_check
          %p314 = pneg %p198
        $region26: #{tpu_custom_call.1} parent=11 // pred_check_branch
          %316 = sbr.rel (%p314) target = $region28
        $region27: #{tpu_custom_call.1} parent=11 // pred_region
          %s318 = ssub.s32 16, 16
          %319 = vsyncadd [#allocation9], %s318
          %s321 = sshll.u32 [#allocation15], 4
          %s322 = int_to_ptr.vmem [resolvable:$true] %s321
          %324 = dma.hbm_to_vmem [thread:$0]  %s6, 16, %s322, [#allocation9]
        $region28: #{tpu_custom_call.1} parent=11 // pred_fallthru
          _
        // Predicated region
        $region29: #{tpu_custom_call.1} parent=11 // pred_check
          %p325 = pneg %p219
        $region30: #{tpu_custom_call.1} parent=11 // pred_check_branch
          %327 = sbr.rel (%p325) target = $region32
        $region31: #{tpu_custom_call.1} parent=11 // pred_region
          %s329 = ssub.s32 256, 256
          %330 = vsyncadd [#allocation12], %s329
          %s331 = sshll.u32 [#allocation16], 4
          %s332 = int_to_ptr.vmem [resolvable:$true] %s331
          %337 = dma.hbm_to_vmem [thread:$0]  %s7, 256, %s332, [#allocation12], 64, 64, 4
        $region32: #{tpu_custom_call.1} parent=11 // pred_fallthru
          _
        // Predicated region
        $region33: #{tpu_custom_call.1} parent=11 // pred_check
          %p338 = pneg %p240
        $region34: #{tpu_custom_call.1} parent=11 // pred_check_branch
          %340 = sbr.rel (%p338) target = $region36
        $region35: #{tpu_custom_call.1} parent=11 // pred_region
          %s342 = ssub.s32 512, 512
          %343 = vsyncadd [#allocation18], %s342
          %s344 = sshll.u32 [#allocation17], 4
          %s345 = int_to_ptr.vmem [resolvable:$true] %s344
          %350 = dma.hbm_to_vmem [thread:$0]  %s8, 512, %s345, [#allocation18], 64, 64, 4
        $region36: #{tpu_custom_call.1} parent=11 // pred_fallthru
          _
      $region12: #{tpu_custom_call.1} parent=5 // pred_fallthru
        _
      %p351 = scmp.lt.s32.totalorder %s24, 4
      // Predicated region
      $region37: #{tpu_custom_call.1} parent=5 // pred_check
        %p352 = pneg %p351
      $region38: #{tpu_custom_call.1} parent=5 // pred_check_branch
        %354 = sbr.rel (%p352) target = $region40
      $region39: #{tpu_custom_call.1} parent=5 // pred_region
        // Predicated region
        $region41: #{tpu_custom_call.1} parent=39 // pred_check
          %p355 = pneg %p56
        $region42: #{tpu_custom_call.1} parent=39 // pred_check_branch
          %357 = sbr.rel (%p355) target = $region44
        $region43: #{tpu_custom_call.1} parent=39 // pred_region
          %s358 = sand.u32 %s24, 1
          %s359 = scalar_lea.sflag [#allocation6], %s358
          %s360 = sand.u32 %s46, 1
          %s361 = smul.addr %s360, 8
          %s362 = scalar_lea.vmem [#allocation5], %s361
          %s364 = ssub.s32 128, 128
          %365 = vsyncadd %s359, %s364
          %s366 = smul.addr %s31, 128
          %s367 = scalar_lea.hbm %s0, %s366
          %s369 = sshll.u32 %s362, 4
          %s370 = int_to_ptr.vmem [resolvable:$true] %s369
          %372 = dma.hbm_to_vmem [thread:$0]  %s367, 128, %s370, %s359
        $region44: #{tpu_custom_call.1} parent=39 // pred_fallthru
          _
        // Predicated region
        $region45: #{tpu_custom_call.1} parent=39 // pred_check
          %p373 = pneg %p145
        $region46: #{tpu_custom_call.1} parent=39 // pred_check_branch
          %375 = sbr.rel (%p373) target = $region48
        $region47: #{tpu_custom_call.1} parent=39 // pred_region
          %s376 = sand.u32 %s24, 1
          %s377 = scalar_lea.sflag [#allocation6], %s376
          %s378 = sand.u32 %s135, 1
          %s379 = smul.addr %s378, 16
          %s380 = scalar_lea.vmem [#allocation13], %s379
          %s382 = ssub.s32 256, 256
          %383 = vsyncadd %s377, %s382
          %s384 = smul.addr %s32, 4
          %s385 = smul.addr %s384, 64
          %s386 = scalar_lea.hbm %s4, %s385
          %s387 = sshll.u32 %s380, 4
          %s388 = int_to_ptr.vmem [resolvable:$true] %s387
          %393 = dma.hbm_to_vmem [thread:$0]  %s386, 256, %s388, %s377, 64, 64, 4
        $region48: #{tpu_custom_call.1} parent=39 // pred_fallthru
          _
        // Predicated region
        $region49: #{tpu_custom_call.1} parent=39 // pred_check
          %p394 = pneg %p171
        $region50: #{tpu_custom_call.1} parent=39 // pred_check_branch
          %396 = sbr.rel (%p394) target = $region52
        $region51: #{tpu_custom_call.1} parent=39 // pred_region
          %s397 = sand.u32 %s24, 1
          %s398 = scalar_lea.sflag [#allocation6], %s397
          %s399 = sand.u32 %s161, 1
          %s400 = smul.addr %s399, 8
          %s401 = scalar_lea.vmem [#allocation14], %s400
          %s403 = ssub.s32 128, 128
          %404 = vsyncadd %s398, %s403
          %s405 = smul.addr %s32, 2
          %s406 = smul.addr %s405, 64
          %s407 = scalar_lea.hbm %s5, %s406
          %s408 = sshll.u32 %s401, 4
          %s409 = int_to_ptr.vmem [resolvable:$true] %s408
          %414 = dma.hbm_to_vmem [thread:$0]  %s407, 128, %s409, %s398, 64, 64, 4
        $region52: #{tpu_custom_call.1} parent=39 // pred_fallthru
          _
      $region40: #{tpu_custom_call.1} parent=5 // pred_fallthru
        _
      %p415 = scmp.le.s32.totalorder 1, %s24
      %p416 = scmp.lt.s32.totalorder %s24, 5
      %p417 = pnand %p415, %p416
      %p418 = pneg %p417
      // Predicated region
      $region53: #{tpu_custom_call.1} parent=5 // pred_check
        _
      $region54: #{tpu_custom_call.1} parent=5 // pred_check_branch
        %420 = sbr.rel (%p417) target = $region56
      $region55: #{tpu_custom_call.1} parent=5 // pred_region
        %s421 = ssub.s32 %s24, 1
        %s422 = sand.u32 %s29, 1
        %s423 = scalar_lea.sflag [#allocation6], %s422
        %s424 = sand.u32 %s49, 1
        %s425 = smul.addr %s424, 8
        %s426 = scalar_lea.vmem [#allocation5], %s425
        // Predicated region
        $region57: #{tpu_custom_call.1} parent=55 // pred_check
          %p427 = pneg %p62
        $region58: #{tpu_custom_call.1} parent=55 // pred_check_branch
          %429 = sbr.rel (%p427) target = $region60
        $region59: #{tpu_custom_call.1} parent=55 // pred_region
          %430 = dma.done %s423, 128
        $region60: #{tpu_custom_call.1} parent=55 // pred_fallthru
          _
        // Predicated region
        $region61: #{tpu_custom_call.1} parent=55 // pred_check
          %p431 = pneg %p83
        $region62: #{tpu_custom_call.1} parent=55 // pred_check_branch
          %433 = sbr.rel (%p431) target = $region64
        $region63: #{tpu_custom_call.1} parent=55 // pred_region
          %434 = dma.done [#allocation9], 16
        $region64: #{tpu_custom_call.1} parent=55 // pred_fallthru
          _
        // Predicated region
        $region65: #{tpu_custom_call.1} parent=55 // pred_check
          %p435 = pneg %p104
        $region66: #{tpu_custom_call.1} parent=55 // pred_check_branch
          %437 = sbr.rel (%p435) target = $region68
        $region67: #{tpu_custom_call.1} parent=55 // pred_region
          %438 = dma.done [#allocation9], 128
        $region68: #{tpu_custom_call.1} parent=55 // pred_fallthru
          _
        // Predicated region
        $region69: #{tpu_custom_call.1} parent=55 // pred_check
          %p439 = pneg %p125
        $region70: #{tpu_custom_call.1} parent=55 // pred_check_branch
          %441 = sbr.rel (%p439) target = $region72
        $region71: #{tpu_custom_call.1} parent=55 // pred_region
          %442 = dma.done [#allocation12], 128
        $region72: #{tpu_custom_call.1} parent=55 // pred_fallthru
          _
        %s443 = sand.u32 %s29, 1
        %s444 = scalar_lea.sflag [#allocation6], %s443
        %s445 = sand.u32 %s138, 1
        %s446 = smul.addr %s445, 16
        %s447 = scalar_lea.vmem [#allocation13], %s446
        // Predicated region
        $region73: #{tpu_custom_call.1} parent=55 // pred_check
          %p448 = pneg %p151
        $region74: #{tpu_custom_call.1} parent=55 // pred_check_branch
          %450 = sbr.rel (%p448) target = $region76
        $region75: #{tpu_custom_call.1} parent=55 // pred_region
          %451 = dma.done %s444, 256
        $region76: #{tpu_custom_call.1} parent=55 // pred_fallthru
          _
        %s452 = sand.u32 %s29, 1
        %s453 = scalar_lea.sflag [#allocation6], %s452
        %s454 = sand.u32 %s164, 1
        %s455 = smul.addr %s454, 8
        %s456 = scalar_lea.vmem [#allocation14], %s455
        // Predicated region
        $region77: #{tpu_custom_call.1} parent=55 // pred_check
          %p457 = pneg %p177
        $region78: #{tpu_custom_call.1} parent=55 // pred_check_branch
          %459 = sbr.rel (%p457) target = $region80
        $region79: #{tpu_custom_call.1} parent=55 // pred_region
          %460 = dma.done %s453, 128
        $region80: #{tpu_custom_call.1} parent=55 // pred_fallthru
          _
        // Predicated region
        $region81: #{tpu_custom_call.1} parent=55 // pred_check
          %p461 = pneg %p198
        $region82: #{tpu_custom_call.1} parent=55 // pred_check_branch
          %463 = sbr.rel (%p461) target = $region84
        $region83: #{tpu_custom_call.1} parent=55 // pred_region
          %464 = dma.done [#allocation9], 16
        $region84: #{tpu_custom_call.1} parent=55 // pred_fallthru
          _
        // Predicated region
        $region85: #{tpu_custom_call.1} parent=55 // pred_check
          %p465 = pneg %p219
        $region86: #{tpu_custom_call.1} parent=55 // pred_check_branch
          %467 = sbr.rel (%p465) target = $region88
        $region87: #{tpu_custom_call.1} parent=55 // pred_region
          %468 = dma.done [#allocation12], 256
        $region88: #{tpu_custom_call.1} parent=55 // pred_fallthru
          _
        // Predicated region
        $region89: #{tpu_custom_call.1} parent=55 // pred_check
          %p469 = pneg %p240
        $region90: #{tpu_custom_call.1} parent=55 // pred_check_branch
          %471 = sbr.rel (%p469) target = $region92
        $region91: #{tpu_custom_call.1} parent=55 // pred_region
          %472 = dma.done [#allocation18], 512
        $region92: #{tpu_custom_call.1} parent=55 // pred_fallthru
          _
        %s473 = sand.u32 %s29, 1
        %s474 = scalar_lea.sflag [#allocation6], %s473
        %s475 = sand.u32 %s49, 1
        %s476 = smul.addr %s475, 8
        %s477 = scalar_lea.vmem [#allocation5], %s476
        %p478 = pneg %p62
        %p479 = pneg %p59
        %p480 = pneg %p83
        %p481 = pneg %p80
        %p482 = pneg %p104
        %p483 = pneg %p101
        %p484 = pneg %p125
        %p485 = pneg %p122
        %s486 = sand.u32 %s29, 1
        %s487 = scalar_lea.sflag [#allocation6], %s486
        %s488 = sand.u32 %s138, 1
        %s489 = smul.addr %s488, 16
        %s490 = scalar_lea.vmem [#allocation13], %s489
        %p491 = pneg %p151
        %p492 = pneg %p148
        %s493 = sand.u32 %s29, 1
        %s494 = scalar_lea.sflag [#allocation6], %s493
        %s495 = sand.u32 %s164, 1
        %s496 = smul.addr %s495, 8
        %s497 = scalar_lea.vmem [#allocation14], %s496
        %p498 = pneg %p177
        %p499 = pneg %p174
        %p500 = pneg %p198
        %p501 = pneg %p195
        %p502 = pneg %p219
        %p503 = pneg %p216
        %p504 = pneg %p240
        %p505 = pneg %p237
        %p506 = pneg %p266
        %p507 = pneg %p263
        %s508 = sand.u32 %s253, 1
        %s509 = scalar_lea.sflag [#allocation7], %s508
        %s510 = sand.u32 %s253, 1
        %s511 = smul.addr %s510, 8
        %s512 = scalar_lea.vmem [#allocation19], %s511
        %p514 = scmp.eq.s32.totalorder %s34, 0
        // Predicated region
        $region93: #{tpu_custom_call.1} parent=55 // pred_check
          %p515 = pneg %p514
        $region94: #{tpu_custom_call.1} parent=55 // pred_check_branch
          %517 = sbr.rel (%p515) target = $region96
        $region95: #{tpu_custom_call.1} parent=55 // pred_region
          %v518 = vld [vmem:[%s426] sm:$0xff]
          %v519 = vmul.f32 %v518, %v518
          %vm520 = vcmask 261120
          %v521 = vsel %vm520, %v519, 0.0
          %522 = vadd.xlane.f32.xlu0 %v521
          %v523 = vpop.xlane.xlu0 %522
          %v524 = vrcp.pop 32.0
          %v525 = vmul.f32 %v523, %v524
          %v526 = vadd.f32 %v525, 1e-06
          %v527 = vrsqrt.pop %v526
          %v528 = vmul.f32 %v518, %v527
          %v529 = vld [vmem:[#allocation8] sm:$0x1]
          %v531 = vlaneseq
          %v532 = vshrl.u32 %v531, 7
          %v533 = vsub.s32 0, %v532
          %v534 = vrot.slane %v529, %v533
          %v536 = vmul.f32 %v528, %v534
          %v537 = vpack.c.bf16 %v536, %v536
          %vm538 = vcmask 257024
          %539 = vst.msk [vmem:[#allocation2] sm:$0xf] %vm538, %v537
          %540 = vst.msk [vmem:[#allocation3] sm:$0xff] %vm520, %v518
          %v541 = vlaneseq
          %v542 = vshrl.u32 %v541, 7
          %v543 = vlaneseq
          %v544 = vand.u32 %v543, 127
          %vm545 = vcmp.ge.s32.totalorder %v542, %v544
          %v546 = vsel %vm545, 0.0, -1e+30
          %v547 = vpack.c.bf16 %v546, %v546
          %vm548 = vcmask 60416
          %549 = vst.msk [vmem:[#allocation4] sm:$0xf] %vm548, %v547
        $region96: #{tpu_custom_call.1} parent=55 // pred_fallthru
          _
        %v550 = vld [vmem:[#allocation2] sm:$0xf]
        %v551 = vld [vmem:[%s447] sm:$0xf]
        %v552 = vld [vmem:[%s447 + $0x4] sm:$0xf]
        %v553 = vld [vmem:[%s447 + $0x8] sm:$0xf]
        %v554 = vld [vmem:[%s447 + $0xc] sm:$0xf]
        %v559 = vunpack.c.l.b16 %v551
        %v560 = vunpack.c.l.b16 %v552
        %v561 = vunpack.c.l.b16 %v553
        %v562 = vunpack.c.l.b16 %v554
        %v563 = vpack.c.b16 %v560, %v559
        %v564 = vpack.c.b16 %v562, %v561
        %vm567 = vcmask 261120
        %v569 = vsel %vm567, %v550, 0
        %571 = vmatprep.subr.bf16.mxu0 0
        %572 = vmatpush1.bf16.msra.mxu0 %v563
        %573 = vmatprep.subr.bf16.mxu0 0
        %574 = vmatpush1.bf16.msra.mxu0 %v564
        %575 = vmatprep.subr.bf16.mxu0 0
        %576 = vmatpush1.bf16.msra.mxu0 0
        %577 = vmatprep.subr.bf16.mxu0 0
        %578 = vmatpush1.bf16.msra.mxu0 0
        %579 = vmatprep.subr.bf16.mxu0 0
        %580 = vmatpush1.bf16.msra.mxu0 0
        %581 = vmatprep.subr.bf16.mxu0 0
        %582 = vmatpush1.bf16.msra.mxu0 0
        %583 = vmatprep.subr.bf16.mxu0 0
        %584 = vmatpush1.bf16.msra.mxu0 0
        %585 = vmatprep.subr.bf16.mxu0 0
        %586 = vmatpush1.bf16.msra.mxu0 0
        %587 = vmatprep.subr.bf16.mxu0 0
        %588 = vmatpush1.bf16.msra.mxu0 0
        %589 = vmatprep.subr.bf16.mxu0 0
        %590 = vmatpush1.bf16.msra.mxu0 0
        %591 = vmatprep.subr.bf16.mxu0 0
        %592 = vmatpush1.bf16.msra.mxu0 0
        %593 = vmatprep.subr.bf16.mxu0 0
        %594 = vmatpush1.bf16.msra.mxu0 0
        %595 = vmatprep.subr.bf16.mxu0 0
        %596 = vmatpush1.bf16.msra.mxu0 0
        %597 = vmatprep.subr.bf16.mxu0 0
        %598 = vmatpush1.bf16.msra.mxu0 0
        %599 = vmatprep.subr.bf16.mxu0 0
        %600 = vmatpush1.bf16.msra.mxu0 0
        %601 = vmatprep.subr.bf16.mxu0 0
        %602 = vmatpush1.bf16.msra.mxu0 0
        %603 = vmatprep.mubr.bf16.mxu0 0
        %604 = vmatmul.mubr.bf16.gmra.mrb[0].mxu0 %v569
        %v605 = vpop.f32.mrb[0].mxu0
        %v606 = vadd.f32 0.0, %v605
        %v607 = vpop.f32.mrb[0].mxu0
        %v608 = vpop.f32.mrb[0].mxu0
        %v609 = vpop.f32.mrb[0].mxu0
        %610 = vdwg.mxu0
        %v611 = vld [vmem:[#allocation10] sm:$0xff]
        %v612 = vld [vmem:[#allocation11] sm:$0xff]
        %v613 = vld [vmem:[#allocation4] sm:$0xf]
        %v614 = vunpack.c.l.bf16 %v613
        %v615 = vmul.f32 %v606, %v611
        %617 = vrot.lane.b32.xlu0 %v606, 124
        %v618 = vpop.permute.xlu0 %617
        %620 = vrot.lane.b32.xlu0 %v606, 4
        %v621 = vpop.permute.xlu0 %620
        %vm623 = vcmask 31744
        %v624 = vsel %vm623, %v618, %v621
        %v625 = vmul.f32 %v624, %v612
        %v626 = vadd.f32 %v615, %v625
        %628 = vrot.lane.b32.xlu0 %v611, 8
        %v629 = vpop.permute.xlu0 %628
        %v631 = vmul.f32 %v606, %v629
        %632 = vrot.lane.b32.xlu0 %v606, 116
        %v633 = vpop.permute.xlu0 %632
        %v635 = vsel %vm623, %v633, %v618
        %v636 = vmul.f32 %v635, %v612
        %638 = vrot.lane.b32.xlu0 %v636, 8
        %v639 = vpop.permute.xlu0 %638
        %v641 = vadd.f32 %v631, %v639
        %v642 = vpack.c.bf16 %v626, %v626
        %v643 = vpack.c.bf16 %v641, %v641
        %645 = vrot.lane.b32.xlu0 %v643, 120
        %v646 = vpop.permute.xlu0 %645
        %vm647 = vcmask 64512
        %v649 = vsel %vm647, %v642, 0
        %v652 = vsel %vm647, %v646, 0
        %654 = vmatprep.subr.bf16.mxu0 0
        %655 = vmatpush1.bf16.xpose.msra.mxu0 %v652
        %656 = vmatprep.subr.bf16.mxu0 0
        %657 = vmatpush1.bf16.xpose.msra.mxu0 0
        %658 = vmatprep.subr.bf16.mxu0 0
        %659 = vmatpush1.bf16.xpose.msra.mxu0 0
        %660 = vmatprep.subr.bf16.mxu0 0
        %661 = vmatpush1.bf16.xpose.msra.mxu0 0
        %662 = vmatprep.subr.bf16.mxu0 0
        %663 = vmatpush1.bf16.xpose.msra.mxu0 0
        %664 = vmatprep.subr.bf16.mxu0 0
        %665 = vmatpush1.bf16.xpose.msra.mxu0 0
        %666 = vmatprep.subr.bf16.mxu0 0
        %667 = vmatpush1.bf16.xpose.msra.mxu0 0
        %668 = vmatprep.subr.bf16.mxu0 0
        %669 = vmatpush1.bf16.xpose.msra.mxu0 0
        %670 = vmatprep.subr.bf16.mxu0 0
        %671 = vmatpush1.bf16.xpose.msra.mxu0 0
        %672 = vmatprep.subr.bf16.mxu0 0
        %673 = vmatpush1.bf16.xpose.msra.mxu0 0
        %674 = vmatprep.subr.bf16.mxu0 0
        %675 = vmatpush1.bf16.xpose.msra.mxu0 0
        %676 = vmatprep.subr.bf16.mxu0 0
        %677 = vmatpush1.bf16.xpose.msra.mxu0 0
        %678 = vmatprep.subr.bf16.mxu0 0
        %679 = vmatpush1.bf16.xpose.msra.mxu0 0
        %680 = vmatprep.subr.bf16.mxu0 0
        %681 = vmatpush1.bf16.xpose.msra.mxu0 0
        %682 = vmatprep.subr.bf16.mxu0 0
        %683 = vmatpush1.bf16.xpose.msra.mxu0 0
        %684 = vmatprep.subr.bf16.mxu0 0
        %685 = vmatpush1.bf16.xpose.msra.mxu0 0
        %686 = vmatprep.mubr.bf16.mxu0 0
        %687 = vmatmul.mubr.bf16.gmra.mrb[0].mxu0 %v649
        %v688 = vpop.f32.mrb[0].mxu0
        %v689 = vadd.f32 0.0, %v688
        %v690 = vpop.f32.mrb[0].mxu0
        %v691 = vpop.f32.mrb[0].mxu0
        %v692 = vpop.f32.mrb[0].mxu0
        %693 = vdwg.mxu0
        %v694 = vmul.f32 %v689, 0.35355338
        %v695 = vadd.f32 %v694, %v614
        %v696 = vsel %vm647, %v695, -inf
        %697 = vmax.xlane.f32.xlu0 %v696
        %v698 = vpop.xlane.xlu0 %697
        %v699 = vsub.f32 %v695, %v698
        %v700 = vmul.f32 %v699, 1.442695
        %v701 = vpow.pop %v700
        %v702 = vsel %vm647, %v701, 0.0
        %703 = vadd.xlane.f32.xlu0 %v702
        %v704 = vpop.xlane.xlu0 %703
        %v705 = vpack.c.bf16 %v701, %v701
        %v706 = vpack.c.bf16 %v606, %v606
        %708 = vrot.lane.b32.xlu0 %v706, 112
        %v709 = vpop.permute.xlu0 %708
        %v711 = vsel %vm647, %v705, 0
        %vm713 = vcmask 1043456
        %v715 = vsel %vm713, %v709, 0
        %717 = vmatprep.subr.bf16.mxu0 0
        %718 = vmatpush1.bf16.msra.mxu0 %v715
        %719 = vmatprep.subr.bf16.mxu0 0
        %720 = vmatpush1.bf16.msra.mxu0 0
        %721 = vmatprep.subr.bf16.mxu0 0
        %722 = vmatpush1.bf16.msra.mxu0 0
        %723 = vmatprep.subr.bf16.mxu0 0
        %724 = vmatpush1.bf16.msra.mxu0 0
        %725 = vmatprep.subr.bf16.mxu0 0
        %726 = vmatpush1.bf16.msra.mxu0 0
        %727 = vmatprep.subr.bf16.mxu0 0
        %728 = vmatpush1.bf16.msra.mxu0 0
        %729 = vmatprep.subr.bf16.mxu0 0
        %730 = vmatpush1.bf16.msra.mxu0 0
        %731 = vmatprep.subr.bf16.mxu0 0
        %732 = vmatpush1.bf16.msra.mxu0 0
        %733 = vmatprep.subr.bf16.mxu0 0
        %734 = vmatpush1.bf16.msra.mxu0 0
        %735 = vmatprep.subr.bf16.mxu0 0
        %736 = vmatpush1.bf16.msra.mxu0 0
        %737 = vmatprep.subr.bf16.mxu0 0
        %738 = vmatpush1.bf16.msra.mxu0 0
        %739 = vmatprep.subr.bf16.mxu0 0
        %740 = vmatpush1.bf16.msra.mxu0 0
        %741 = vmatprep.subr.bf16.mxu0 0
        %742 = vmatpush1.bf16.msra.mxu0 0
        %743 = vmatprep.subr.bf16.mxu0 0
        %744 = vmatpush1.bf16.msra.mxu0 0
        %745 = vmatprep.subr.bf16.mxu0 0
        %746 = vmatpush1.bf16.msra.mxu0 0
        %747 = vmatprep.subr.bf16.mxu0 0
        %748 = vmatpush1.bf16.msra.mxu0 0
        %749 = vmatprep.mubr.bf16.mxu0 0
        %750 = vmatmul.mubr.bf16.gmra.mrb[0].mxu0 %v711
        %v751 = vpop.f32.mrb[0].mxu0
        %v752 = vadd.f32 0.0, %v751
        %v753 = vpop.f32.mrb[0].mxu0
        %v754 = vpop.f32.mrb[0].mxu0
        %v755 = vpop.f32.mrb[0].mxu0
        %756 = vdwg.mxu0
        %v757 = vrcp.pop %v704
        %v758 = vmul.f32 %v752, %v757
        %v759 = vpack.c.bf16 %v758, %v758
        %760 = vrot.lane.b32.xlu0 %v611, 24
        %v761 = vpop.permute.xlu0 %760
        %v763 = vmul.f32 %v606, %v761
        %764 = vrot.lane.b32.xlu0 %v606, 100
        %v765 = vpop.permute.xlu0 %764
        %767 = vrot.lane.b32.xlu0 %v606, 108
        %v768 = vpop.permute.xlu0 %767
        %v770 = vsel %vm623, %v765, %v768
        %v771 = vmul.f32 %v770, %v612
        %773 = vrot.lane.b32.xlu0 %v771, 24
        %v774 = vpop.permute.xlu0 %773
        %v776 = vadd.f32 %v763, %v774
        %777 = vrot.lane.b32.xlu0 %v611, 32
        %v778 = vpop.permute.xlu0 %777
        %v780 = vmul.f32 %v606, %v778
        %781 = vrot.lane.b32.xlu0 %v606, 92
        %v782 = vpop.permute.xlu0 %781
        %v784 = vsel %vm623, %v782, %v765
        %v785 = vmul.f32 %v784, %v612
        %787 = vrot.lane.b32.xlu0 %v785, 32
        %v788 = vpop.permute.xlu0 %787
        %v790 = vadd.f32 %v780, %v788
        %v791 = vpack.c.bf16 %v776, %v776
        %v792 = vpack.c.bf16 %v790, %v790
        %794 = vrot.lane.b32.xlu0 %v791, 104
        %v795 = vpop.permute.xlu0 %794
        %797 = vrot.lane.b32.xlu0 %v792, 96
        %v798 = vpop.permute.xlu0 %797
        %v800 = vsel %vm647, %v795, 0
        %v803 = vsel %vm647, %v798, 0
        %805 = vmatprep.subr.bf16.mxu0 0
        %806 = vmatpush1.bf16.xpose.msra.mxu0 %v803
        %807 = vmatprep.subr.bf16.mxu0 0
        %808 = vmatpush1.bf16.xpose.msra.mxu0 0
        %809 = vmatprep.subr.bf16.mxu0 0
        %810 = vmatpush1.bf16.xpose.msra.mxu0 0
        %811 = vmatprep.subr.bf16.mxu0 0
        %812 = vmatpush1.bf16.xpose.msra.mxu0 0
        %813 = vmatprep.subr.bf16.mxu0 0
        %814 = vmatpush1.bf16.xpose.msra.mxu0 0
        %815 = vmatprep.subr.bf16.mxu0 0
        %816 = vmatpush1.bf16.xpose.msra.mxu0 0
        %817 = vmatprep.subr.bf16.mxu0 0
        %818 = vmatpush1.bf16.xpose.msra.mxu0 0
        %819 = vmatprep.subr.bf16.mxu0 0
        %820 = vmatpush1.bf16.xpose.msra.mxu0 0
        %821 = vmatprep.subr.bf16.mxu0 0
        %822 = vmatpush1.bf16.xpose.msra.mxu0 0
        %823 = vmatprep.subr.bf16.mxu0 0
        %824 = vmatpush1.bf16.xpose.msra.mxu0 0
        %825 = vmatprep.subr.bf16.mxu0 0
        %826 = vmatpush1.bf16.xpose.msra.mxu0 0
        %827 = vmatprep.subr.bf16.mxu0 0
        %828 = vmatpush1.bf16.xpose.msra.mxu0 0
        %829 = vmatprep.subr.bf16.mxu0 0
        %830 = vmatpush1.bf16.xpose.msra.mxu0 0
        %831 = vmatprep.subr.bf16.mxu0 0
        %832 = vmatpush1.bf16.xpose.msra.mxu0 0
        %833 = vmatprep.subr.bf16.mxu0 0
        %834 = vmatpush1.bf16.xpose.msra.mxu0 0
        %835 = vmatprep.subr.bf16.mxu0 0
        %836 = vmatpush1.bf16.xpose.msra.mxu0 0
        %837 = vmatprep.mubr.bf16.mxu0 0
        %838 = vmatmul.mubr.bf16.gmra.mrb[0].mxu0 %v800
        %v839 = vpop.f32.mrb[0].mxu0
        %v840 = vadd.f32 0.0, %v839
        %v841 = vpop.f32.mrb[0].mxu0
        %v842 = vpop.f32.mrb[0].mxu0
        %v843 = vpop.f32.mrb[0].mxu0
        %844 = vdwg.mxu0
        %v845 = vmul.f32 %v840, 0.35355338
        %v846 = vadd.f32 %v845, %v614
        %v847 = vsel %vm647, %v846, -inf
        %848 = vmax.xlane.f32.xlu0 %v847
        %v849 = vpop.xlane.xlu0 %848
        %v850 = vsub.f32 %v846, %v849
        %v851 = vmul.f32 %v850, 1.442695
        %v852 = vpow.pop %v851
        %v853 = vsel %vm647, %v852, 0.0
        %854 = vadd.xlane.f32.xlu0 %v853
        %v855 = vpop.xlane.xlu0 %854
        %v856 = vpack.c.bf16 %v852, %v852
        %857 = vrot.lane.b32.xlu0 %v706, 88
        %v858 = vpop.permute.xlu0 %857
        %v860 = vsel %vm647, %v856, 0
        %v863 = vsel %vm713, %v858, 0
        %865 = vmatprep.subr.bf16.mxu0 0
        %866 = vmatpush1.bf16.msra.mxu0 %v863
        %867 = vmatprep.subr.bf16.mxu0 0
        %868 = vmatpush1.bf16.msra.mxu0 0
        %869 = vmatprep.subr.bf16.mxu0 0
        %870 = vmatpush1.bf16.msra.mxu0 0
        %871 = vmatprep.subr.bf16.mxu0 0
        %872 = vmatpush1.bf16.msra.mxu0 0
        %873 = vmatprep.subr.bf16.mxu0 0
        %874 = vmatpush1.bf16.msra.mxu0 0
        %875 = vmatprep.subr.bf16.mxu0 0
        %876 = vmatpush1.bf16.msra.mxu0 0
        %877 = vmatprep.subr.bf16.mxu0 0
        %878 = vmatpush1.bf16.msra.mxu0 0
        %879 = vmatprep.subr.bf16.mxu0 0
        %880 = vmatpush1.bf16.msra.mxu0 0
        %881 = vmatprep.subr.bf16.mxu0 0
        %882 = vmatpush1.bf16.msra.mxu0 0
        %883 = vmatprep.subr.bf16.mxu0 0
        %884 = vmatpush1.bf16.msra.mxu0 0
        %885 = vmatprep.subr.bf16.mxu0 0
        %886 = vmatpush1.bf16.msra.mxu0 0
        %887 = vmatprep.subr.bf16.mxu0 0
        %888 = vmatpush1.bf16.msra.mxu0 0
        %889 = vmatprep.subr.bf16.mxu0 0
        %890 = vmatpush1.bf16.msra.mxu0 0
        %891 = vmatprep.subr.bf16.mxu0 0
        %892 = vmatpush1.bf16.msra.mxu0 0
        %893 = vmatprep.subr.bf16.mxu0 0
        %894 = vmatpush1.bf16.msra.mxu0 0
        %895 = vmatprep.subr.bf16.mxu0 0
        %896 = vmatpush1.bf16.msra.mxu0 0
        %897 = vmatprep.mubr.bf16.mxu0 0
        %898 = vmatmul.mubr.bf16.gmra.mrb[0].mxu0 %v860
        %v899 = vpop.f32.mrb[0].mxu0
        %v900 = vadd.f32 0.0, %v899
        %v901 = vpop.f32.mrb[0].mxu0
        %v902 = vpop.f32.mrb[0].mxu0
        %v903 = vpop.f32.mrb[0].mxu0
        %904 = vdwg.mxu0
        %v905 = vrcp.pop %v855
        %v906 = vmul.f32 %v900, %v905
        %v907 = vpack.c.bf16 %v906, %v906
        %909 = vrot.lane.b32.xlu0 %v907, 8
        %v910 = vpop.permute.xlu0 %909
        %v913 = vsel %vm647, %v759, %v910
        %v914 = vld [vmem:[#allocation3] sm:$0xff]
        %v915 = vld [vmem:[%s456] sm:$0xf]
        %v916 = vld [vmem:[%s456 + $0x4] sm:$0xf]
        %v919 = vunpack.c.l.b16 %v915
        %v920 = vunpack.c.l.b16 %v916
        %v921 = vpack.c.b16 %v920, %v919
        %vm923 = vcmask 130048
        %v924 = vsel %vm923, %v913, 0
        %926 = vmatprep.subr.bf16.mxu0 0
        %927 = vmatpush1.bf16.msra.mxu0 %v921
        %928 = vmatprep.subr.bf16.mxu0 0
        %929 = vmatpush1.bf16.msra.mxu0 0
        %930 = vmatprep.subr.bf16.mxu0 0
        %931 = vmatpush1.bf16.msra.mxu0 0
        %932 = vmatprep.subr.bf16.mxu0 0
        %933 = vmatpush1.bf16.msra.mxu0 0
        %934 = vmatprep.subr.bf16.mxu0 0
        %935 = vmatpush1.bf16.msra.mxu0 0
        %936 = vmatprep.subr.bf16.mxu0 0
        %937 = vmatpush1.bf16.msra.mxu0 0
        %938 = vmatprep.subr.bf16.mxu0 0
        %939 = vmatpush1.bf16.msra.mxu0 0
        %940 = vmatprep.subr.bf16.mxu0 0
        %941 = vmatpush1.bf16.msra.mxu0 0
        %942 = vmatprep.subr.bf16.mxu0 0
        %943 = vmatpush1.bf16.msra.mxu0 0
        %944 = vmatprep.subr.bf16.mxu0 0
        %945 = vmatpush1.bf16.msra.mxu0 0
        %946 = vmatprep.subr.bf16.mxu0 0
        %947 = vmatpush1.bf16.msra.mxu0 0
        %948 = vmatprep.subr.bf16.mxu0 0
        %949 = vmatpush1.bf16.msra.mxu0 0
        %950 = vmatprep.subr.bf16.mxu0 0
        %951 = vmatpush1.bf16.msra.mxu0 0
        %952 = vmatprep.subr.bf16.mxu0 0
        %953 = vmatpush1.bf16.msra.mxu0 0
        %954 = vmatprep.subr.bf16.mxu0 0
        %955 = vmatpush1.bf16.msra.mxu0 0
        %956 = vmatprep.subr.bf16.mxu0 0
        %957 = vmatpush1.bf16.msra.mxu0 0
        %958 = vmatprep.mubr.bf16.mxu0 0
        %959 = vmatmul.mubr.bf16.gmra.mrb[0].mxu0 %v924
        %v960 = vpop.f32.mrb[0].mxu0
        %v961 = vadd.f32 0.0, %v960
        %v962 = vpop.f32.mrb[0].mxu0
        %v963 = vpop.f32.mrb[0].mxu0
        %v964 = vpop.f32.mrb[0].mxu0
        %965 = vdwg.mxu0
        %v966 = vadd.f32 %v914, %v961
        %967 = vst.msk [vmem:[#allocation3] sm:$0xff] %vm567, %v966
        %p968 = scmp.eq.s32.totalorder %s34, 1
        // Predicated region
        $region97: #{tpu_custom_call.1} parent=55 // pred_check
          %p969 = pneg %p968
        $region98: #{tpu_custom_call.1} parent=55 // pred_check_branch
          %971 = sbr.rel (%p969) target = $region100
        $region99: #{tpu_custom_call.1} parent=55 // pred_region
          %v972 = vld [vmem:[#allocation3] sm:$0xff]
          %v973 = vmul.f32 %v972, %v972
          %v974 = vsel %vm567, %v973, 0.0
          %975 = vadd.xlane.f32.xlu0 %v974
          %v976 = vpop.xlane.xlu0 %975
          %v977 = vrcp.pop 32.0
          %v978 = vmul.f32 %v976, %v977
          %v979 = vadd.f32 %v978, 1e-06
          %v980 = vrsqrt.pop %v979
          %v981 = vmul.f32 %v972, %v980
          %v982 = vld [vmem:[#allocation15] sm:$0x1]
          %v984 = vlaneseq
          %v985 = vshrl.u32 %v984, 7
          %v986 = vsub.s32 0, %v985
          %v987 = vrot.slane %v982, %v986
          %v989 = vmul.f32 %v981, %v987
          %v990 = vpack.c.bf16 %v989, %v989
          %v991 = vld [vmem:[#allocation16] sm:$0xf]
          %v992 = vld [vmem:[#allocation16 + $0x4] sm:$0xf]
          %v993 = vld [vmem:[#allocation16 + $0x8] sm:$0xf]
          %v994 = vld [vmem:[#allocation16 + $0xc] sm:$0xf]
          %v999 = vunpack.c.l.b16 %v991
          %v1000 = vunpack.c.l.b16 %v992
          %v1001 = vunpack.c.l.b16 %v993
          %v1002 = vunpack.c.l.b16 %v994
          %v1003 = vpack.c.b16 %v1000, %v999
          %v1004 = vpack.c.b16 %v1002, %v1001
          %v1008 = vsel %vm567, %v990, 0
          %1010 = vmatprep.subr.bf16.mxu0 0
          %1011 = vmatpush1.bf16.msra.mxu0 %v1003
          %1012 = vmatprep.subr.bf16.mxu0 0
          %1013 = vmatpush1.bf16.msra.mxu0 %v1004
          %1014 = vmatprep.subr.bf16.mxu0 0
          %1015 = vmatpush1.bf16.msra.mxu0 0
          %1016 = vmatprep.subr.bf16.mxu0 0
          %1017 = vmatpush1.bf16.msra.mxu0 0
          %1018 = vmatprep.subr.bf16.mxu0 0
          %1019 = vmatpush1.bf16.msra.mxu0 0
          %1020 = vmatprep.subr.bf16.mxu0 0
          %1021 = vmatpush1.bf16.msra.mxu0 0
          %1022 = vmatprep.subr.bf16.mxu0 0
          %1023 = vmatpush1.bf16.msra.mxu0 0
          %1024 = vmatprep.subr.bf16.mxu0 0
          %1025 = vmatpush1.bf16.msra.mxu0 0
          %1026 = vmatprep.subr.bf16.mxu0 0
          %1027 = vmatpush1.bf16.msra.mxu0 0
          %1028 = vmatprep.subr.bf16.mxu0 0
          %1029 = vmatpush1.bf16.msra.mxu0 0
          %1030 = vmatprep.subr.bf16.mxu0 0
          %1031 = vmatpush1.bf16.msra.mxu0 0
          %1032 = vmatprep.subr.bf16.mxu0 0
          %1033 = vmatpush1.bf16.msra.mxu0 0
          %1034 = vmatprep.subr.bf16.mxu0 0
          %1035 = vmatpush1.bf16.msra.mxu0 0
          %1036 = vmatprep.subr.bf16.mxu0 0
          %1037 = vmatpush1.bf16.msra.mxu0 0
          %1038 = vmatprep.subr.bf16.mxu0 0
          %1039 = vmatpush1.bf16.msra.mxu0 0
          %1040 = vmatprep.subr.bf16.mxu0 0
          %1041 = vmatpush1.bf16.msra.mxu0 0
          %1042 = vmatprep.mubr.bf16.mxu0 0
          %1043 = vmatmul.mubr.bf16.gmra.mrb[0].mxu0 %v1008
          %v1044 = vpop.f32.mrb[0].mxu0
          %v1045 = vadd.f32 0.0, %v1044
          %v1046 = vpop.f32.mrb[0].mxu0
          %v1047 = vpop.f32.mrb[0].mxu0
          %v1048 = vpop.f32.mrb[0].mxu0
          %1049 = vdwg.mxu0
          %v1050 = vxor.u32 %v1045, 2147483648
          %v1051 = vmul.f32 %v1050, 1.442695
          %v1052 = vpow.pop %v1051
          %v1053 = vadd.f32 %v1052, 1.0
          %v1054 = vrcp.pop %v1053
          %v1055 = vmul.f32 1.0, %v1054
          %v1056 = vmul.f32 %v1045, %v1055
          %1058 = vrot.lane.b32.xlu0 %v1045, 64
          %v1059 = vpop.permute.xlu0 %1058
          %v1061 = vmul.f32 %v1056, %v1059
          %v1062 = vpack.c.bf16 %v1061, %v1061
          %v1063 = vld [vmem:[#allocation17] sm:$0xf]
          %v1064 = vld [vmem:[#allocation17 + $0x4] sm:$0xf]
          %v1065 = vld [vmem:[#allocation17 + $0x8] sm:$0xf]
          %v1066 = vld [vmem:[#allocation17 + $0xc] sm:$0xf]
          %v1067 = vld [vmem:[#allocation17 + $0x10] sm:$0xf]
          %v1068 = vld [vmem:[#allocation17 + $0x14] sm:$0xf]
          %v1069 = vld [vmem:[#allocation17 + $0x18] sm:$0xf]
          %v1070 = vld [vmem:[#allocation17 + $0x1c] sm:$0xf]
          %v1079 = vunpack.c.l.b16 %v1063
          %v1080 = vunpack.c.l.b16 %v1064
          %v1081 = vunpack.c.l.b16 %v1065
          %v1082 = vunpack.c.l.b16 %v1066
          %v1083 = vunpack.c.l.b16 %v1067
          %v1084 = vunpack.c.l.b16 %v1068
          %v1085 = vunpack.c.l.b16 %v1069
          %v1086 = vunpack.c.l.b16 %v1070
          %v1087 = vpack.c.b16 %v1080, %v1079
          %v1088 = vpack.c.b16 %v1082, %v1081
          %v1089 = vpack.c.b16 %v1084, %v1083
          %v1090 = vpack.c.b16 %v1086, %v1085
          %vm1095 = vcmask 523264
          %v1097 = vsel %vm1095, %v1062, 0
          %1099 = vmatprep.subr.bf16.mxu0 0
          %1100 = vmatpush1.bf16.msra.mxu0 %v1087
          %1101 = vmatprep.subr.bf16.mxu0 0
          %1102 = vmatpush1.bf16.msra.mxu0 %v1088
          %1103 = vmatprep.subr.bf16.mxu0 0
          %1104 = vmatpush1.bf16.msra.mxu0 %v1089
          %1105 = vmatprep.subr.bf16.mxu0 0
          %1106 = vmatpush1.bf16.msra.mxu0 %v1090
          %1107 = vmatprep.subr.bf16.mxu0 0
          %1108 = vmatpush1.bf16.msra.mxu0 0
          %1109 = vmatprep.subr.bf16.mxu0 0
          %1110 = vmatpush1.bf16.msra.mxu0 0
          %1111 = vmatprep.subr.bf16.mxu0 0
          %1112 = vmatpush1.bf16.msra.mxu0 0
          %1113 = vmatprep.subr.bf16.mxu0 0
          %1114 = vmatpush1.bf16.msra.mxu0 0
          %1115 = vmatprep.subr.bf16.mxu0 0
          %1116 = vmatpush1.bf16.msra.mxu0 0
          %1117 = vmatprep.subr.bf16.mxu0 0
          %1118 = vmatpush1.bf16.msra.mxu0 0
          %1119 = vmatprep.subr.bf16.mxu0 0
          %1120 = vmatpush1.bf16.msra.mxu0 0
          %1121 = vmatprep.subr.bf16.mxu0 0
          %1122 = vmatpush1.bf16.msra.mxu0 0
          %1123 = vmatprep.subr.bf16.mxu0 0
          %1124 = vmatpush1.bf16.msra.mxu0 0
          %1125 = vmatprep.subr.bf16.mxu0 0
          %1126 = vmatpush1.bf16.msra.mxu0 0
          %1127 = vmatprep.subr.bf16.mxu0 0
          %1128 = vmatpush1.bf16.msra.mxu0 0
          %1129 = vmatprep.subr.bf16.mxu0 0
          %1130 = vmatpush1.bf16.msra.mxu0 0
          %1131 = vmatprep.mubr.bf16.mxu0 0
          %1132 = vmatmul.mubr.bf16.gmra.mrb[0].mxu0 %v1097
          %v1133 = vpop.f32.mrb[0].mxu0
          %v1134 = vadd.f32 0.0, %v1133
          %v1135 = vpop.f32.mrb[0].mxu0
          %v1136 = vpop.f32.mrb[0].mxu0
          %v1137 = vpop.f32.mrb[0].mxu0
          %1138 = vdwg.mxu0
          %v1139 = vadd.f32 %v972, %v1134
          %1140 = vst.msk [vmem:[%s512] sm:$0xff] %vm567, %v1139
        $region100: #{tpu_custom_call.1} parent=55 // pred_fallthru
          _
        %s1141 = sand.u32 %s253, 1
        %s1142 = scalar_lea.sflag [#allocation7], %s1141
        %s1143 = sand.u32 %s253, 1
        %s1144 = smul.addr %s1143, 8
        %s1145 = scalar_lea.vmem [#allocation19], %s1144
        // Predicated region
        $region101: #{tpu_custom_call.1} parent=55 // pred_check
          %p1146 = pneg %p263
        $region102: #{tpu_custom_call.1} parent=55 // pred_check_branch
          %1148 = sbr.rel (%p1146) target = $region104
        $region103: #{tpu_custom_call.1} parent=55 // pred_region
          %s1150 = ssub.s32 128, 128
          %1151 = vsyncadd %s1142, %s1150
          %s1152 = smul.addr %s33, 128
          %s1153 = scalar_lea.hbm %s9, %s1152
          %s1155 = sshll.u32 %s1145, 4
          %s1156 = int_to_ptr.vmem [resolvable:$true] %s1155
          %1158 = dma.vmem_to_hbm [thread:$0]  %s1156, 128, %s1153, %s1142
        $region104: #{tpu_custom_call.1} parent=55 // pred_fallthru
          _
      $region56: #{tpu_custom_call.1} parent=5 // pred_fallthru
        _
      %p1159 = scmp.le.s32.totalorder 2, %s24
      // Predicated region
      $region105: #{tpu_custom_call.1} parent=5 // pred_check
        %p1160 = pneg %p1159
      $region106: #{tpu_custom_call.1} parent=5 // pred_check_branch
        %1162 = sbr.rel (%p1160) target = $region108
      $region107: #{tpu_custom_call.1} parent=5 // pred_region
        %s1163 = ssub.s32 %s24, 2
        // Predicated region
        $region109: #{tpu_custom_call.1} parent=107 // pred_check
          %p1164 = pneg %p269
        $region110: #{tpu_custom_call.1} parent=107 // pred_check_branch
          %1166 = sbr.rel (%p1164) target = $region112
        $region111: #{tpu_custom_call.1} parent=107 // pred_region
          %s1167 = sand.u32 %s254, 1
          %s1168 = scalar_lea.sflag [#allocation7], %s1167
          %s1169 = sand.u32 %s254, 1
          %s1170 = smul.addr %s1169, 8
          %s1171 = scalar_lea.vmem [#allocation19], %s1170
          %1172 = dma.done %s1168, 128
        $region112: #{tpu_custom_call.1} parent=107 // pred_fallthru
          _
      $region108: #{tpu_custom_call.1} parent=5 // pred_fallthru
        _
    $region6: #{tpu_custom_call.1} parent=1 // loop_footer
      %s28 = sadd.s32 1, %s24
    $region7: #{tpu_custom_call.1} parent=1 // loop_footer_branch
      %23 = sbr.rel target = $region3
    $region8: #{tpu_custom_call.1} parent=1 // loop_exit
      _
    %1173 = vsyncpa [#allocation6], 1
    %s1174 = scalar_lea.sflag [#allocation6], 1
    %1175 = vsyncpa %s1174, 1
    %1176 = vsyncpa [#allocation9], 1
    %1177 = vsyncpa [#allocation12], 1
    %1178 = vsyncpa [#allocation18], 1
    %1179 = vsyncpa [#allocation7], 1
    %s1180 = scalar_lea.sflag [#allocation7], 1
    %1181 = vsyncpa %s1180, 1

</llo_original>
